<compile_context>
chip_gen: v5e
topology: v5e:2x2
jax: 0.10.0
libtpu: 0.0.40
codegen_flags: <defaults>
</compile_context>

<pallas_src>
import functools

import numpy as np
import jax
import jax.numpy as jnp
from jax.experimental import pallas as pl
from jax.experimental.pallas import tpu as pltpu

NUM_STRIPES = 6
_LANES = 128          # lane width of the stripe-distance / DP block (native vreg)
_BIG = 1.0e9          # finite "infinity" for DP boundary masks
_NEG = -1.0e30        # finite -inf for masked max
_POS = 1.0e30         # finite +inf for masked min


def _triplet_kernel(avg_ref, feats_ref, eye_ref, pos_ref, neg_ref, cols_ref,
                    valid_ref, cbig_ref, maskl_ref, masku_ref, norig_ref,
                    o_ref, *, n_pad, d, margin, inv_n):
    D = NUM_STRIPES * d

    # ---- chunk centers (mean over each chunk) via one MXU matmul -------------
    # feats stays in its input dtype (bf16 feeds the MXU natively).
    centers = jnp.dot(avg_ref[...], feats_ref[...],
                      preferred_element_type=jnp.float32)            # (n_pad, D)

    # ---- global pairwise euclidean distance matrix ----------------------------
    gram = jax.lax.dot_general(centers, centers, (((1,), (1,)), ((), ())),
                               preferred_element_type=jnp.float32)   # (n_pad, n_pad)
    diag = gram * eye_ref[...]                 # host-precomputed eye, no iotas
    sq_col = jnp.sum(diag, axis=1, keepdims=True)        # (n_pad, 1)
    sq_row = jnp.sum(diag, axis=0, keepdims=True)        # (1, n_pad) same source
    dist = jnp.sqrt(jnp.maximum(sq_col + sq_row - 2.0 * gram, 1e-12))

    # ---- hard positive / negative mining --------------------------------------
    pos = pos_ref[...] > 0.5
    neg = neg_ref[...] > 0.5
    cols = cols_ref[...]
    dist_ap = jnp.max(jnp.where(pos, dist, _NEG), axis=1, keepdims=True)
    dist_an = jnp.min(jnp.where(neg, dist, _POS), axis=1, keepdims=True)

    # first matching column index (matches torch/np first-index tie behaviour)
    p_sel = jnp.logical_and(pos, dist == dist_ap)
    n_sel = jnp.logical_and(neg, dist == dist_an)
    none_col = jnp.float32(n_pad)
    p_idx = jnp.min(jnp.where(p_sel, cols, none_col), axis=1, keepdims=True)
    n_idx = jnp.min(jnp.where(n_sel, cols, none_col), axis=1, keepdims=True)
    p_onehot = (cols == p_idx).astype(jnp.float32)        # (n_pad, n_pad)
    n_onehot = (cols == n_idx).astype(jnp.float32)        # (n_pad, n_pad)
    # NOTE: each real row of pn_onehot sums to 1 (dist_ap/dist_an come from the
    # exact same dist values, so the equality always hits at least one column).

    # gather BOTH hard rows with one one-hot MXU matmul (8-aligned row concat)
    pn_onehot = jnp.concatenate([p_onehot, n_onehot], axis=0)         # (2n_pad, n_pad)
    b_stack = jnp.dot(pn_onehot, centers,
                      preferred_element_type=jnp.float32)             # (2n_pad, D)
    a_stack = jnp.concatenate([centers, centers], axis=0)             # (2n_pad, D)

    # ---- local stripe distances via the stripe-norm identity ------------------
    # dsq[:, i*6+j] = ||a_i||^2 + ||b_j||^2 - 2 <a_i, b_j>.  All pieces are
    # stripe-summed into 36 (padded to 128) lane-dense columns by ONE constant
    # (8D, 128) matmul; no O(D^2) constants anywhere.
    bb = jnp.concatenate([b_stack, b_stack], axis=1)                  # (2n_pad, 2D)
    pieces = [a_stack * a_stack, b_stack * b_stack]
    for s in range(NUM_STRIPES):
        pieces.append(a_stack * bb[:, s * d: s * d + D])              # a * shift_s(b)
    big = jnp.concatenate(pieces, axis=1)                             # (2n_pad, 8D)
    dsq = jnp.dot(big, cbig_ref[...],
                  preferred_element_type=jnp.float32)                 # (2n_pad, 128)

    ld = jnp.sqrt(jnp.maximum(dsq, 1e-12))
    # (e^d - 1) / (e^d + 1) == tanh(d / 2): one EUP op over the whole block
    fmat = jnp.tanh(0.5 * ld)                                         # (2n_pad, 128)

    # ---- 6x6 shortest-path DP as an anti-diagonal wavefront --------------------
    maskl = maskl_ref[...]   # +BIG where the left predecessor (j == 0) is invalid
    masku = masku_ref[...]   # +BIG where the up   predecessor (i == 0) is invalid
    norig = norig_ref[...]   # 0.0 at the origin column, 1.0 elsewhere
    dp = fmat
    for _ in range(2 * NUM_STRIPES - 2):                 # 10 wavefront steps
        left = pltpu.roll(dp, shift=1, axis=1)           # dp[:, c-1]
        up = pltpu.roll(dp, shift=NUM_STRIPES, axis=1)   # dp[:, c-6]
        pred = jnp.minimum(left + maskl, up + masku)
        dp = fmat + norig * pred
    last = NUM_STRIPES * NUM_STRIPES - 1
    dpf = dp[:, last:last + 1]                                        # (2n_pad, 1)

    # ---- local_ap - local_an via 8-aligned sublane slices ----------------------
    local_gap = dpf[:n_pad, :] - dpf[n_pad:, :]                       # (n_pad, 1)

    # ---- margin ranking losses (reduction='mean', y = 1) ------------------------
    g = jnp.maximum(dist_ap - dist_an + margin, 0.0)                  # (n_pad, 1)
    l = jnp.maximum(local_gap + margin, 0.0)                          # (n_pad, 1)
    per_row = (g + l) * valid_ref[...]              # padded rows masked out
    o_ref[...] = jnp.sum(per_row, axis=0, keepdims=True) * inv_n      # (1, 1)


@functools.lru_cache(maxsize=None)
def _build_triplet_fn(labels_key, B, D, margin, dtype_name):
    """Host-side (cached): unique labels, averaging matrix, masks, stripe-sum
    constant, DP boundary masks, and the jitted pallas_call closure."""
    labels_np = np.asarray(labels_key, dtype=np.int64)
    label_uni = np.unique(labels_np)                     # sorted, like torch.unique
    label_num = int(label_uni.shape[0])
    n = 3 * label_num
    assert B % n == 0, "batch must split evenly into 3 * num_unique_labels chunks"
    assert D % NUM_STRIPES == 0, "feat_dim must be divisible by 6"
    d = D // NUM_STRIPES
    chunk = B // n
    n_pad = ((n + 7) // 8) * 8        # sublane-align all axis-0 stacking / splits

    targets = np.concatenate([label_uni, label_uni, label_uni])

    avg = np.zeros((n_pad, B), np.float32)
    for i in range(n):
        avg[i, i * chunk:(i + 1) * chunk] = 1.0 / chunk

    eye = np.eye(n_pad, dtype=np.float32)
    same = targets[:, None] == targets[None, :]
    pos = np.zeros((n_pad, n_pad), np.float32)
    neg = np.zeros((n_pad, n_pad), np.float32)
    pos[:n, :n] = same
    neg[:n, :n] = ~same
    # Padded rows: self is both the "hardest positive" and "hardest negative",
    # so every reduce/one-hot stays finite; their loss rows are zeroed by `valid`.
    for i in range(n, n_pad):
        pos[i, i] = 1.0
        neg[i, i] = 1.0
    cols = np.broadcast_to(np.arange(n_pad, dtype=np.float32)[None, :],
                           (n_pad, n_pad)).copy()
    valid = np.zeros((n_pad, 1), np.float32)
    valid[:n, 0] = 1.0

    # (8D, 128) constant: stripe-sums [a*a | b*b | a*shift_s(b), s=0..5] into
    # dsq columns c = i*6 + j (anchor stripe i, gathered stripe j).
    cbig = np.zeros((8 * D, _LANES), np.float32)
    for i in range(NUM_STRIPES):
        for j in range(NUM_STRIPES):
            c = i * NUM_STRIPES + j
            s = (j - i) % NUM_STRIPES
            for k in range(d):
                cbig[0 * D + i * d + k, c] += 1.0        # ||a_i||^2
                cbig[1 * D + j * d + k, c] += 1.0        # ||b_j||^2
                cbig[(2 + s) * D + i * d + k, c] += -2.0  # -2 <a_i, b_j>

    # DP wavefront boundary masks over the 128 padded lanes.
    maskl = np.full((1, _LANES), _BIG, np.float32)
    masku = np.full((1, _LANES), _BIG, np.float32)
    norig = np.ones((1, _LANES), np.float32)
    for i in range(NUM_STRIPES):
        for j in range(NUM_STRIPES):
            c = i * NUM_STRIPES + j
            maskl[0, c] = _BIG if j == 0 else 0.0
            masku[0, c] = _BIG if i == 0 else 0.0
    norig[0, 0] = 0.0

    dtype = jnp.bfloat16 if dtype_name == "bfloat16" else jnp.float32
    kernel = functools.partial(_triplet_kernel, n_pad=n_pad, d=d,
                               margin=float(margin), inv_n=1.0 / n)
    vmem = pl.BlockSpec(memory_space=pltpu.MemorySpace.VMEM)
    call = pl.pallas_call(
        kernel,
        out_shape=jax.ShapeDtypeStruct((1, 1), jnp.float32),
        in_specs=[vmem] * 11,
        out_specs=vmem,
    )

    avg_j = jnp.asarray(avg).astype(dtype)   # matches feats dtype -> native MXU
    eye_j = jnp.asarray(eye)
    pos_j = jnp.asarray(pos)
    neg_j = jnp.asarray(neg)
    cols_j = jnp.asarray(cols)
    valid_j = jnp.asarray(valid)
    cbig_j = jnp.asarray(cbig)
    maskl_j = jnp.asarray(maskl)
    masku_j = jnp.asarray(masku)
    norig_j = jnp.asarray(norig)

    @jax.jit
    def run(feats):
        return call(avg_j, feats, eye_j, pos_j, neg_j, cols_j, valid_j,
                    cbig_j, maskl_j, masku_j, norig_j)[0, 0]

    return run


def triplet_loss_aligned_reid(feats, labels, local_features, margin=0.3):
    """JAX/Pallas equivalent of TripletLossAlignedReID1.forward."""
    feats = jnp.asarray(feats)
    if feats.dtype not in (jnp.float32, jnp.bfloat16):
        feats = feats.astype(jnp.float32)
    B, D = feats.shape
    labels_key = tuple(int(x) for x in np.asarray(labels).reshape(-1))
    # `local_features` is permuted-but-unused in the reference forward; the dead
    # transpose is intentionally not dispatched.
    del local_features
    fn = _build_triplet_fn(labels_key, int(B), int(D), float(margin),
                           jnp.dtype(feats.dtype).name)
    return fn(feats)


def reference_loss(feats, labels, margin=0.3):
    """Pure numpy re-implementation of the PyTorch forward (for checking)."""
    feats = np.asarray(feats, np.float64)
    labels = np.asarray(labels)
    label_uni = np.unique(labels)
    label_num = len(label_uni)
    n = 3 * label_num
    targets = np.concatenate([label_uni] * 3)
    B, D = feats.shape
    chunk = B // n
    centers = feats.reshape(n, chunk, D).mean(axis=1)

    sq = (centers ** 2).sum(1, keepdims=True)
    dist = sq + sq.T - 2.0 * centers @ centers.T
    dist = np.sqrt(np.clip(dist, 1e-12, None))

    is_pos = targets[:, None] == targets[None, :]
    dist_ap = np.where(is_pos, dist, -np.inf).max(1)
    dist_an = np.where(is_pos, np.inf, dist).min(1)
    p_inds = np.argmax(np.where(is_pos, dist, -np.inf), axis=1)
    n_inds = np.argmin(np.where(is_pos, np.inf, dist), axis=1)

    d = D // NUM_STRIPES
    x = centers.reshape(n, NUM_STRIPES, d)

    def local_dist(x, y):
        xx = (x ** 2).sum(-1)[:, :, None]
        yy = (y ** 2).sum(-1)[:, None, :]
        dm = xx + yy - 2.0 * np.einsum('nid,njd->nij', x, y)
        dm = np.sqrt(np.clip(dm, 1e-12, None))
        dm = (np.exp(dm) - 1.0) / (np.exp(dm) + 1.0)
        dp = np.zeros_like(dm)
        for i in range(NUM_STRIPES):
            for j in range(NUM_STRIPES):
                if i == 0 and j == 0:
                    dp[:, i, j] = dm[:, i, j]
                elif i == 0:
                    dp[:, i, j] = dp[:, i, j - 1] + dm[:, i, j]
                elif j == 0:
                    dp[:, i, j] = dp[:, i - 1, j] + dm[:, i, j]
                else:
                    dp[:, i, j] = np.minimum(dp[:, i - 1, j], dp[:, i, j - 1]) + dm[:, i, j]
        return dp[:, -1, -1]

    local_ap = local_dist(x, centers[p_inds].reshape(n, NUM_STRIPES, d))
    local_an = local_dist(x, centers[n_inds].reshape(n, NUM_STRIPES, d))

    g = np.maximum(dist_ap - dist_an + margin, 0.0).mean()
    loc = np.maximum(local_ap - local_an + margin, 0.0).mean()
    return g + loc


if __name__ == "__main__":
    key = jax.random.PRNGKey(0)
    k1, k2 = jax.random.split(key)

    # 4 unique labels -> 12 "centers"; batch = 24 (2 samples per chunk); D = 48
    labels = jnp.array([0, 1, 2, 3, 0, 1, 2, 3], dtype=jnp.int32)
    B, D = 24, 48
    feats = jax.random.normal(k1, (B, D), dtype=jnp.float32)
    # (batch, local_dim, num_stripes); permuted-but-unused in the reference forward
    local_features = jax.random.normal(k2, (B, D // NUM_STRIPES, NUM_STRIPES),
                                       dtype=jnp.float32)

    out = triplet_loss_aligned_reid(feats, labels, local_features, margin=0.3)
    out = jax.block_until_ready(out)

    ref = reference_loss(np.asarray(feats), np.asarray(labels), margin=0.3)
    np.testing.assert_allclose(float(out), float(ref), rtol=2e-3, atol=2e-3)
    print("KERNEL_OK")
</pallas_src>

<mosaic_0001>
module attributes {stable_mosaic.version = 11 : i64} {
  func.func @_triplet_kernel(%arg0: memref<16x24xf32, #tpu.memory_space<vmem>>, %arg1: memref<24x48xf32, #tpu.memory_space<vmem>>, %arg2: memref<16x16xf32, #tpu.memory_space<vmem>>, %arg3: memref<16x16xf32, #tpu.memory_space<vmem>>, %arg4: memref<16x16xf32, #tpu.memory_space<vmem>>, %arg5: memref<16x16xf32, #tpu.memory_space<vmem>>, %arg6: memref<16x1xf32, #tpu.memory_space<vmem>>, %arg7: memref<384x128xf32, #tpu.memory_space<vmem>>, %arg8: memref<1x128xf32, #tpu.memory_space<vmem>>, %arg9: memref<1x128xf32, #tpu.memory_space<vmem>>, %arg10: memref<1x128xf32, #tpu.memory_space<vmem>>, %arg11: memref<1x1xf32, #tpu.memory_space<vmem>>) attributes {dimension_semantics = [], scalar_prefetch = 0 : i64, scratch_operands = 0 : i64, tpu.core_type = #tpu.core_type<tc>} {
    %c0 = arith.constant 0 : index
    %c0_0 = arith.constant 0 : index
    %0 = vector.load %arg0[%c0, %c0_0] : memref<16x24xf32, #tpu.memory_space<vmem>>, vector<16x24xf32>
    %c0_1 = arith.constant 0 : index
    %c0_2 = arith.constant 0 : index
    %1 = vector.load %arg1[%c0_1, %c0_2] : memref<24x48xf32, #tpu.memory_space<vmem>>, vector<24x48xf32>
    %cst = arith.constant dense<0.000000e+00> : vector<16x48xf32>
    %2 = tpu.matmul %0, %1, %cst {dimension_numbers = #tpu.dot_dimension_numbers<[1], [0], [0], [1], [0, 0, 1, 1], [], []>} : vector<16x24xf32>, vector<24x48xf32>, vector<16x48xf32> -> vector<16x48xf32>
    %cst_3 = arith.constant dense<0.000000e+00> : vector<16x16xf32>
    %3 = tpu.matmul %2, %2, %cst_3 {dimension_numbers = #tpu.dot_dimension_numbers<[1], [1], [0], [0], [0, 0, 1, 0], [], []>} : vector<16x48xf32>, vector<16x48xf32>, vector<16x16xf32> -> vector<16x16xf32>
    %c0_4 = arith.constant 0 : index
    %c0_5 = arith.constant 0 : index
    %4 = vector.load %arg2[%c0_4, %c0_5] : memref<16x16xf32, #tpu.memory_space<vmem>>, vector<16x16xf32>
    %5 = arith.mulf %3, %4 : vector<16x16xf32>
    %cst_6 = arith.constant dense<0.000000e+00> : vector<16xf32>
    %6 = vector.multi_reduction <add>, %5, %cst_6 [1] : vector<16x16xf32> to vector<16xf32>
    %7 = vector.shape_cast %6 : vector<16xf32> to vector<16x1xf32>
    %cst_7 = arith.constant dense<0.000000e+00> : vector<16xf32>
    %8 = vector.multi_reduction <add>, %5, %cst_7 [0] : vector<16x16xf32> to vector<16xf32>
    %9 = vector.shape_cast %8 : vector<16xf32> to vector<1x16xf32>
    %10 = vector.broadcast %7 : vector<16x1xf32> to vector<16x16xf32>
    %11 = vector.broadcast %9 : vector<1x16xf32> to vector<16x16xf32>
    %12 = arith.addf %10, %11 : vector<16x16xf32>
    %cst_8 = arith.constant 2.000000e+00 : f32
    %13 = vector.broadcast %cst_8 : f32 to vector<16x16xf32>
    %14 = arith.mulf %13, %3 : vector<16x16xf32>
    %15 = arith.subf %12, %14 : vector<16x16xf32>
    %cst_9 = arith.constant 9.99999996E-13 : f32
    %16 = vector.broadcast %cst_9 : f32 to vector<16x16xf32>
    %17 = arith.maximumf %15, %16 : vector<16x16xf32>
    %18 = math.sqrt %17 : vector<16x16xf32>
    %c0_10 = arith.constant 0 : index
    %c0_11 = arith.constant 0 : index
    %19 = vector.load %arg3[%c0_10, %c0_11] : memref<16x16xf32, #tpu.memory_space<vmem>>, vector<16x16xf32>
    %cst_12 = arith.constant 5.000000e-01 : f32
    %20 = vector.broadcast %cst_12 : f32 to vector<16x16xf32>
    %21 = arith.cmpf ogt, %19, %20 : vector<16x16xf32>
    %c0_13 = arith.constant 0 : index
    %c0_14 = arith.constant 0 : index
    %22 = vector.load %arg4[%c0_13, %c0_14] : memref<16x16xf32, #tpu.memory_space<vmem>>, vector<16x16xf32>
    %cst_15 = arith.constant 5.000000e-01 : f32
    %23 = vector.broadcast %cst_15 : f32 to vector<16x16xf32>
    %24 = arith.cmpf ogt, %22, %23 : vector<16x16xf32>
    %c0_16 = arith.constant 0 : index
    %c0_17 = arith.constant 0 : index
    %25 = vector.load %arg5[%c0_16, %c0_17] : memref<16x16xf32, #tpu.memory_space<vmem>>, vector<16x16xf32>
    %cst_18 = arith.constant -1.000000e+30 : f32
    %26 = vector.broadcast %cst_18 : f32 to vector<16x16xf32>
    %27 = arith.select %21, %18, %26 : vector<16x16xi1>, vector<16x16xf32>
    %cst_19 = arith.constant dense<0xFF800000> : vector<16xf32>
    %28 = vector.multi_reduction <maximumf>, %27, %cst_19 [1] : vector<16x16xf32> to vector<16xf32>
    %29 = vector.shape_cast %28 : vector<16xf32> to vector<16x1xf32>
    %cst_20 = arith.constant 1.000000e+30 : f32
    %30 = vector.broadcast %cst_20 : f32 to vector<16x16xf32>
    %31 = arith.select %24, %18, %30 : vector<16x16xi1>, vector<16x16xf32>
    %cst_21 = arith.constant dense<0x7F800000> : vector<16xf32>
    %32 = vector.multi_reduction <minimumf>, %31, %cst_21 [1] : vector<16x16xf32> to vector<16xf32>
    %33 = vector.shape_cast %32 : vector<16xf32> to vector<16x1xf32>
    %34 = vector.broadcast %29 : vector<16x1xf32> to vector<16x16xf32>
    %35 = arith.cmpf oeq, %18, %34 : vector<16x16xf32>
    %36 = arith.andi %21, %35 : vector<16x16xi1>
    %37 = vector.broadcast %33 : vector<16x1xf32> to vector<16x16xf32>
    %38 = arith.cmpf oeq, %18, %37 : vector<16x16xf32>
    %39 = arith.andi %24, %38 : vector<16x16xi1>
    %cst_22 = arith.constant 1.600000e+01 : f32
    %40 = vector.broadcast %cst_22 : f32 to vector<16x16xf32>
    %41 = arith.select %36, %25, %40 : vector<16x16xi1>, vector<16x16xf32>
    %cst_23 = arith.constant dense<0x7F800000> : vector<16xf32>
    %42 = vector.multi_reduction <minimumf>, %41, %cst_23 [1] : vector<16x16xf32> to vector<16xf32>
    %43 = vector.shape_cast %42 : vector<16xf32> to vector<16x1xf32>
    %cst_24 = arith.constant 1.600000e+01 : f32
    %44 = vector.broadcast %cst_24 : f32 to vector<16x16xf32>
    %45 = arith.select %39, %25, %44 : vector<16x16xi1>, vector<16x16xf32>
    %cst_25 = arith.constant dense<0x7F800000> : vector<16xf32>
    %46 = vector.multi_reduction <minimumf>, %45, %cst_25 [1] : vector<16x16xf32> to vector<16xf32>
    %47 = vector.shape_cast %46 : vector<16xf32> to vector<16x1xf32>
    %48 = vector.broadcast %43 : vector<16x1xf32> to vector<16x16xf32>
    %49 = arith.cmpf oeq, %25, %48 : vector<16x16xf32>
    %50 = arith.extui %49 : vector<16x16xi1> to vector<16x16xi32>
    %51 = arith.sitofp %50 : vector<16x16xi32> to vector<16x16xf32>
    %52 = vector.broadcast %47 : vector<16x1xf32> to vector<16x16xf32>
    %53 = arith.cmpf oeq, %25, %52 : vector<16x16xf32>
    %54 = arith.extui %53 : vector<16x16xi1> to vector<16x16xi32>
    %55 = arith.sitofp %54 : vector<16x16xi32> to vector<16x16xf32>
    %56 = tpu.concatenate %51, %55 in 0 : vector<16x16xf32>, vector<16x16xf32> -> vector<32x16xf32>
    %cst_26 = arith.constant dense<0.000000e+00> : vector<32x48xf32>
    %57 = tpu.matmul %56, %2, %cst_26 {dimension_numbers = #tpu.dot_dimension_numbers<[1], [0], [0], [1], [0, 0, 1, 1], [], []>} : vector<32x16xf32>, vector<16x48xf32>, vector<32x48xf32> -> vector<32x48xf32>
    %58 = tpu.concatenate %2, %2 in 0 : vector<16x48xf32>, vector<16x48xf32> -> vector<32x48xf32>
    %59 = tpu.concatenate %57, %57 in 1 : vector<32x48xf32>, vector<32x48xf32> -> vector<32x96xf32>
    %60 = arith.mulf %58, %58 : vector<32x48xf32>
    %61 = arith.mulf %57, %57 : vector<32x48xf32>
    %62 = vector.extract_strided_slice %59 {offsets = [0, 0], sizes = [32, 48], strides = [1, 1]} : vector<32x96xf32> to vector<32x48xf32>
    %63 = arith.mulf %58, %62 : vector<32x48xf32>
    %64 = vector.extract_strided_slice %59 {offsets = [0, 8], sizes = [32, 48], strides = [1, 1]} : vector<32x96xf32> to vector<32x48xf32>
    %65 = arith.mulf %58, %64 : vector<32x48xf32>
    %66 = vector.extract_strided_slice %59 {offsets = [0, 16], sizes = [32, 48], strides = [1, 1]} : vector<32x96xf32> to vector<32x48xf32>
    %67 = arith.mulf %58, %66 : vector<32x48xf32>
    %68 = vector.extract_strided_slice %59 {offsets = [0, 24], sizes = [32, 48], strides = [1, 1]} : vector<32x96xf32> to vector<32x48xf32>
    %69 = arith.mulf %58, %68 : vector<32x48xf32>
    %70 = vector.extract_strided_slice %59 {offsets = [0, 32], sizes = [32, 48], strides = [1, 1]} : vector<32x96xf32> to vector<32x48xf32>
    %71 = arith.mulf %58, %70 : vector<32x48xf32>
    %72 = vector.extract_strided_slice %59 {offsets = [0, 40], sizes = [32, 48], strides = [1, 1]} : vector<32x96xf32> to vector<32x48xf32>
    %73 = arith.mulf %58, %72 : vector<32x48xf32>
    %74 = tpu.concatenate %60, %61, %63, %65, %67, %69, %71, %73 in 1 : vector<32x48xf32>, vector<32x48xf32>, vector<32x48xf32>, vector<32x48xf32>, vector<32x48xf32>, vector<32x48xf32>, vector<32x48xf32>, vector<32x48xf32> -> vector<32x384xf32>
    %c0_27 = arith.constant 0 : index
    %c0_28 = arith.constant 0 : index
    %75 = vector.load %arg7[%c0_27, %c0_28] : memref<384x128xf32, #tpu.memory_space<vmem>>, vector<384x128xf32>
    %cst_29 = arith.constant dense<0.000000e+00> : vector<32x128xf32>
    %76 = tpu.matmul %74, %75, %cst_29 {dimension_numbers = #tpu.dot_dimension_numbers<[1], [0], [0], [1], [0, 0, 1, 1], [], []>} : vector<32x384xf32>, vector<384x128xf32>, vector<32x128xf32> -> vector<32x128xf32>
    %cst_30 = arith.constant 9.99999996E-13 : f32
    %77 = vector.broadcast %cst_30 : f32 to vector<32x128xf32>
    %78 = arith.maximumf %76, %77 : vector<32x128xf32>
    %79 = math.sqrt %78 : vector<32x128xf32>
    %cst_31 = arith.constant 5.000000e-01 : f32
    %80 = vector.broadcast %cst_31 : f32 to vector<32x128xf32>
    %81 = arith.mulf %80, %79 : vector<32x128xf32>
    %82 = math.tanh %81 : vector<32x128xf32>
    %c0_32 = arith.constant 0 : index
    %c0_33 = arith.constant 0 : index
    %83 = vector.load %arg8[%c0_32, %c0_33] : memref<1x128xf32, #tpu.memory_space<vmem>>, vector<1x128xf32>
    %c0_34 = arith.constant 0 : index
    %c0_35 = arith.constant 0 : index
    %84 = vector.load %arg9[%c0_34, %c0_35] : memref<1x128xf32, #tpu.memory_space<vmem>>, vector<1x128xf32>
    %c0_36 = arith.constant 0 : index
    %c0_37 = arith.constant 0 : index
    %85 = vector.load %arg10[%c0_36, %c0_37] : memref<1x128xf32, #tpu.memory_space<vmem>>, vector<1x128xf32>
    %c1_i32 = arith.constant 1 : i32
    %86 = tpu.dynamic_rotate %82 by %c1_i32 dim 1 : vector<32x128xf32>, i32 -> vector<32x128xf32>
    %c6_i32 = arith.constant 6 : i32
    %87 = tpu.dynamic_rotate %82 by %c6_i32 dim 1 : vector<32x128xf32>, i32 -> vector<32x128xf32>
    %88 = vector.broadcast %83 : vector<1x128xf32> to vector<32x128xf32>
    %89 = arith.addf %86, %88 : vector<32x128xf32>
    %90 = vector.broadcast %84 : vector<1x128xf32> to vector<32x128xf32>
    %91 = arith.addf %87, %90 : vector<32x128xf32>
    %92 = arith.minimumf %89, %91 : vector<32x128xf32>
    %93 = vector.broadcast %85 : vector<1x128xf32> to vector<32x128xf32>
    %94 = arith.mulf %93, %92 : vector<32x128xf32>
    %95 = arith.addf %82, %94 : vector<32x128xf32>
    %c1_i32_38 = arith.constant 1 : i32
    %96 = tpu.dynamic_rotate %95 by %c1_i32_38 dim 1 : vector<32x128xf32>, i32 -> vector<32x128xf32>
    %c6_i32_39 = arith.constant 6 : i32
    %97 = tpu.dynamic_rotate %95 by %c6_i32_39 dim 1 : vector<32x128xf32>, i32 -> vector<32x128xf32>
    %98 = vector.broadcast %83 : vector<1x128xf32> to vector<32x128xf32>
    %99 = arith.addf %96, %98 : vector<32x128xf32>
    %100 = vector.broadcast %84 : vector<1x128xf32> to vector<32x128xf32>
    %101 = arith.addf %97, %100 : vector<32x128xf32>
    %102 = arith.minimumf %99, %101 : vector<32x128xf32>
    %103 = vector.broadcast %85 : vector<1x128xf32> to vector<32x128xf32>
    %104 = arith.mulf %103, %102 : vector<32x128xf32>
    %105 = arith.addf %82, %104 : vector<32x128xf32>
    %c1_i32_40 = arith.constant 1 : i32
    %106 = tpu.dynamic_rotate %105 by %c1_i32_40 dim 1 : vector<32x128xf32>, i32 -> vector<32x128xf32>
    %c6_i32_41 = arith.constant 6 : i32
    %107 = tpu.dynamic_rotate %105 by %c6_i32_41 dim 1 : vector<32x128xf32>, i32 -> vector<32x128xf32>
    %108 = vector.broadcast %83 : vector<1x128xf32> to vector<32x128xf32>
    %109 = arith.addf %106, %108 : vector<32x128xf32>
    %110 = vector.broadcast %84 : vector<1x128xf32> to vector<32x128xf32>
    %111 = arith.addf %107, %110 : vector<32x128xf32>
    %112 = arith.minimumf %109, %111 : vector<32x128xf32>
    %113 = vector.broadcast %85 : vector<1x128xf32> to vector<32x128xf32>
    %114 = arith.mulf %113, %112 : vector<32x128xf32>
    %115 = arith.addf %82, %114 : vector<32x128xf32>
    %c1_i32_42 = arith.constant 1 : i32
    %116 = tpu.dynamic_rotate %115 by %c1_i32_42 dim 1 : vector<32x128xf32>, i32 -> vector<32x128xf32>
    %c6_i32_43 = arith.constant 6 : i32
    %117 = tpu.dynamic_rotate %115 by %c6_i32_43 dim 1 : vector<32x128xf32>, i32 -> vector<32x128xf32>
    %118 = vector.broadcast %83 : vector<1x128xf32> to vector<32x128xf32>
    %119 = arith.addf %116, %118 : vector<32x128xf32>
    %120 = vector.broadcast %84 : vector<1x128xf32> to vector<32x128xf32>
    %121 = arith.addf %117, %120 : vector<32x128xf32>
    %122 = arith.minimumf %119, %121 : vector<32x128xf32>
    %123 = vector.broadcast %85 : vector<1x128xf32> to vector<32x128xf32>
    %124 = arith.mulf %123, %122 : vector<32x128xf32>
    %125 = arith.addf %82, %124 : vector<32x128xf32>
    %c1_i32_44 = arith.constant 1 : i32
    %126 = tpu.dynamic_rotate %125 by %c1_i32_44 dim 1 : vector<32x128xf32>, i32 -> vector<32x128xf32>
    %c6_i32_45 = arith.constant 6 : i32
    %127 = tpu.dynamic_rotate %125 by %c6_i32_45 dim 1 : vector<32x128xf32>, i32 -> vector<32x128xf32>
    %128 = vector.broadcast %83 : vector<1x128xf32> to vector<32x128xf32>
    %129 = arith.addf %126, %128 : vector<32x128xf32>
    %130 = vector.broadcast %84 : vector<1x128xf32> to vector<32x128xf32>
    %131 = arith.addf %127, %130 : vector<32x128xf32>
    %132 = arith.minimumf %129, %131 : vector<32x128xf32>
    %133 = vector.broadcast %85 : vector<1x128xf32> to vector<32x128xf32>
    %134 = arith.mulf %133, %132 : vector<32x128xf32>
    %135 = arith.addf %82, %134 : vector<32x128xf32>
    %c1_i32_46 = arith.constant 1 : i32
    %136 = tpu.dynamic_rotate %135 by %c1_i32_46 dim 1 : vector<32x128xf32>, i32 -> vector<32x128xf32>
    %c6_i32_47 = arith.constant 6 : i32
    %137 = tpu.dynamic_rotate %135 by %c6_i32_47 dim 1 : vector<32x128xf32>, i32 -> vector<32x128xf32>
    %138 = vector.broadcast %83 : vector<1x128xf32> to vector<32x128xf32>
    %139 = arith.addf %136, %138 : vector<32x128xf32>
    %140 = vector.broadcast %84 : vector<1x128xf32> to vector<32x128xf32>
    %141 = arith.addf %137, %140 : vector<32x128xf32>
    %142 = arith.minimumf %139, %141 : vector<32x128xf32>
    %143 = vector.broadcast %85 : vector<1x128xf32> to vector<32x128xf32>
    %144 = arith.mulf %143, %142 : vector<32x128xf32>
    %145 = arith.addf %82, %144 : vector<32x128xf32>
    %c1_i32_48 = arith.constant 1 : i32
    %146 = tpu.dynamic_rotate %145 by %c1_i32_48 dim 1 : vector<32x128xf32>, i32 -> vector<32x128xf32>
    %c6_i32_49 = arith.constant 6 : i32
    %147 = tpu.dynamic_rotate %145 by %c6_i32_49 dim 1 : vector<32x128xf32>, i32 -> vector<32x128xf32>
    %148 = vector.broadcast %83 : vector<1x128xf32> to vector<32x128xf32>
    %149 = arith.addf %146, %148 : vector<32x128xf32>
    %150 = vector.broadcast %84 : vector<1x128xf32> to vector<32x128xf32>
    %151 = arith.addf %147, %150 : vector<32x128xf32>
    %152 = arith.minimumf %149, %151 : vector<32x128xf32>
    %153 = vector.broadcast %85 : vector<1x128xf32> to vector<32x128xf32>
    %154 = arith.mulf %153, %152 : vector<32x128xf32>
    %155 = arith.addf %82, %154 : vector<32x128xf32>
    %c1_i32_50 = arith.constant 1 : i32
    %156 = tpu.dynamic_rotate %155 by %c1_i32_50 dim 1 : vector<32x128xf32>, i32 -> vector<32x128xf32>
    %c6_i32_51 = arith.constant 6 : i32
    %157 = tpu.dynamic_rotate %155 by %c6_i32_51 dim 1 : vector<32x128xf32>, i32 -> vector<32x128xf32>
    %158 = vector.broadcast %83 : vector<1x128xf32> to vector<32x128xf32>
    %159 = arith.addf %156, %158 : vector<32x128xf32>
    %160 = vector.broadcast %84 : vector<1x128xf32> to vector<32x128xf32>
    %161 = arith.addf %157, %160 : vector<32x128xf32>
    %162 = arith.minimumf %159, %161 : vector<32x128xf32>
    %163 = vector.broadcast %85 : vector<1x128xf32> to vector<32x128xf32>
    %164 = arith.mulf %163, %162 : vector<32x128xf32>
    %165 = arith.addf %82, %164 : vector<32x128xf32>
    %c1_i32_52 = arith.constant 1 : i32
    %166 = tpu.dynamic_rotate %165 by %c1_i32_52 dim 1 : vector<32x128xf32>, i32 -> vector<32x128xf32>
    %c6_i32_53 = arith.constant 6 : i32
    %167 = tpu.dynamic_rotate %165 by %c6_i32_53 dim 1 : vector<32x128xf32>, i32 -> vector<32x128xf32>
    %168 = vector.broadcast %83 : vector<1x128xf32> to vector<32x128xf32>
    %169 = arith.addf %166, %168 : vector<32x128xf32>
    %170 = vector.broadcast %84 : vector<1x128xf32> to vector<32x128xf32>
    %171 = arith.addf %167, %170 : vector<32x128xf32>
    %172 = arith.minimumf %169, %171 : vector<32x128xf32>
    %173 = vector.broadcast %85 : vector<1x128xf32> to vector<32x128xf32>
    %174 = arith.mulf %173, %172 : vector<32x128xf32>
    %175 = arith.addf %82, %174 : vector<32x128xf32>
    %c1_i32_54 = arith.constant 1 : i32
    %176 = tpu.dynamic_rotate %175 by %c1_i32_54 dim 1 : vector<32x128xf32>, i32 -> vector<32x128xf32>
    %c6_i32_55 = arith.constant 6 : i32
    %177 = tpu.dynamic_rotate %175 by %c6_i32_55 dim 1 : vector<32x128xf32>, i32 -> vector<32x128xf32>
    %178 = vector.broadcast %83 : vector<1x128xf32> to vector<32x128xf32>
    %179 = arith.addf %176, %178 : vector<32x128xf32>
    %180 = vector.broadcast %84 : vector<1x128xf32> to vector<32x128xf32>
    %181 = arith.addf %177, %180 : vector<32x128xf32>
    %182 = arith.minimumf %179, %181 : vector<32x128xf32>
    %183 = vector.broadcast %85 : vector<1x128xf32> to vector<32x128xf32>
    %184 = arith.mulf %183, %182 : vector<32x128xf32>
    %185 = arith.addf %82, %184 : vector<32x128xf32>
    %186 = vector.extract_strided_slice %185 {offsets = [0, 35], sizes = [32, 1], strides = [1, 1]} : vector<32x128xf32> to vector<32x1xf32>
    %187 = vector.extract_strided_slice %186 {offsets = [0, 0], sizes = [16, 1], strides = [1, 1]} : vector<32x1xf32> to vector<16x1xf32>
    %188 = vector.extract_strided_slice %186 {offsets = [16, 0], sizes = [16, 1], strides = [1, 1]} : vector<32x1xf32> to vector<16x1xf32>
    %189 = arith.subf %187, %188 : vector<16x1xf32>
    %190 = arith.subf %29, %33 : vector<16x1xf32>
    %cst_56 = arith.constant 3.000000e-01 : f32
    %191 = vector.broadcast %cst_56 : f32 to vector<16x1xf32>
    %192 = arith.addf %190, %191 : vector<16x1xf32>
    %cst_57 = arith.constant 0.000000e+00 : f32
    %193 = vector.broadcast %cst_57 : f32 to vector<16x1xf32>
    %194 = arith.maximumf %192, %193 : vector<16x1xf32>
    %cst_58 = arith.constant 3.000000e-01 : f32
    %195 = vector.broadcast %cst_58 : f32 to vector<16x1xf32>
    %196 = arith.addf %189, %195 : vector<16x1xf32>
    %cst_59 = arith.constant 0.000000e+00 : f32
    %197 = vector.broadcast %cst_59 : f32 to vector<16x1xf32>
    %198 = arith.maximumf %196, %197 : vector<16x1xf32>
    %199 = arith.addf %194, %198 : vector<16x1xf32>
    %c0_60 = arith.constant 0 : index
    %c0_61 = arith.constant 0 : index
    %200 = vector.load %arg6[%c0_60, %c0_61] : memref<16x1xf32, #tpu.memory_space<vmem>>, vector<16x1xf32>
    %201 = arith.mulf %199, %200 : vector<16x1xf32>
    %cst_62 = arith.constant dense<0.000000e+00> : vector<1xf32>
    %202 = vector.multi_reduction <add>, %201, %cst_62 [0] : vector<16x1xf32> to vector<1xf32>
    %203 = vector.shape_cast %202 : vector<1xf32> to vector<1x1xf32>
    %cst_63 = arith.constant 0.0833333358 : f32
    %204 = vector.broadcast %cst_63 : f32 to vector<1x1xf32>
    %205 = arith.mulf %203, %204 : vector<1x1xf32>
    %c0_64 = arith.constant 0 : index
    %c0_65 = arith.constant 0 : index
    %206 = vector.load %arg11[%c0_64, %c0_65] : memref<1x1xf32, #tpu.memory_space<vmem>>, vector<1x1xf32>
    tpu.vector_store %arg11[%c0_64, %c0_65], %205 {strides = array<i32>} : memref<1x1xf32, #tpu.memory_space<vmem>>, vector<1x1xf32>,
    return
  }
}

</mosaic_0001>

<llo_original>
// kernel: run.1
$region0: #{run.1}
  #allocation0 [shape = 'u32[]', space=smem, size = 0x4, offset = 0x4, fixed_abs, tag = 'smem constant byte address 0x4 - core index']
  #allocation1 [shape = 'u32[72,128]{1,0:T(1,128)}', space=vmem, size = 0x9000, scoped, tag = 'internal scratch']
  %s0 = inlined_call_operand.hbm [shape: f32[16,24], index: 0, kind: input, shape index: {}]
  %s1 = inlined_call_operand.hbm [shape: f32[24,48], index: 1, kind: input, shape index: {}]
  %s2 = inlined_call_operand.hbm [shape: f32[16,16], index: 2, kind: input, shape index: {}]
  %s3 = inlined_call_operand.hbm [shape: f32[16,16], index: 3, kind: input, shape index: {}]
  %s4 = inlined_call_operand.hbm [shape: f32[16,16], index: 4, kind: input, shape index: {}]
  %s5 = inlined_call_operand.hbm [shape: f32[16,16], index: 5, kind: input, shape index: {}]
  %s6 = inlined_call_operand.hbm [shape: f32[16,1], index: 6, kind: input, shape index: {}]
  %s7 = inlined_call_operand.hbm [shape: f32[384,128], index: 7, kind: input, shape index: {}]
  %s8 = inlined_call_operand.vmem [shape: f32[1,128], index: 8, kind: input, shape index: {}]
  %s9 = inlined_call_operand.vmem [shape: f32[1,128], index: 9, kind: input, shape index: {}]
  %s10 = inlined_call_operand.vmem [shape: f32[1,128], index: 10, kind: input, shape index: {}]
  %s11 = inlined_call_operand.hbm [shape: f32[1,1], index: 11, kind: output, shape index: {}]
  %s12 = sld [smem:[#allocation0]]
  $region86: #{run.1} parent=0
    _
  %s14 = ssub.s32 1, %s12
  %s15 = scalar_select 0, %s14, %s12
  $region1: #{run.1} parent=0
    #allocation2 [shape = 'u8[8192]{0}', space=vmem, size = 0x2000, scoped, tag = 'input window, operand 0, single buffered']
    #allocation3 [shape = 's32[1]{0}', space=sflag, size = 0x4, scoped, tag = 'scoped memory for run.1']
    #allocation4 [shape = 's32[1]{0}', space=sflag, size = 0x4, scoped, tag = 'scoped memory for run.1']
    #allocation5 [shape = 'u8[12288]{0}', space=vmem, size = 0x3000, scoped, tag = 'input window, operand 1, single buffered']
    #allocation6 [shape = 's32[1]{0}', space=sflag, size = 0x4, scoped, tag = 'scoped memory for run.1']
    #allocation7 [shape = 'u8[8192]{0}', space=vmem, size = 0x2000, scoped, tag = 'input window, operand 2, single buffered']
    #allocation8 [shape = 'u8[8192]{0}', space=vmem, size = 0x2000, scoped, tag = 'input window, operand 3, single buffered']
    #allocation9 [shape = 's32[1]{0}', space=sflag, size = 0x4, scoped, tag = 'scoped memory for run.1']
    #allocation10 [shape = 'u8[8192]{0}', space=vmem, size = 0x2000, scoped, tag = 'input window, operand 4, single buffered']
    #allocation11 [shape = 'u8[8192]{0}', space=vmem, size = 0x2000, scoped, tag = 'input window, operand 5, single buffered']
    #allocation12 [shape = 's32[1]{0}', space=sflag, size = 0x4, scoped, tag = 'scoped memory for run.1']
    #allocation13 [shape = 'u8[8192]{0}', space=vmem, size = 0x2000, scoped, tag = 'input window, operand 6, single buffered']
    #allocation14 [shape = 'u8[196608]{0}', space=vmem, size = 0x30000, scoped, tag = 'input window, operand 7, single buffered']
    #allocation15 [shape = 's32[1]{0}', space=sflag, size = 0x4, scoped, tag = 'scoped memory for run.1']
    #allocation16 [shape = 'u8[512]{0}', space=vmem, size = 0x400, scoped, tag = 'output window, operand 0, single buffered']
    %16 = vsyncpa [#allocation3], 0
    %17 = vsyncpa [#allocation6], 0
    %18 = vsyncpa [#allocation9], 0
    %19 = vsyncpa [#allocation12], 0
    %20 = vsyncpa [#allocation15], 0
    %21 = vsyncpa [#allocation4], 0
    // Predicated region
    $region2: #{run.1} parent=1 // pred_check
      _
    $region3: #{run.1} parent=1 // pred_check_branch
      %23 = sbr.rel (0) target = $region5
    $region4: #{run.1} parent=1 // pred_region
      %25 = vsyncadd [#allocation3], 0
      %s26 = sshll.u32 %s0, 4
      %s27 = int_to_ptr.hbm [resolvable:$true] %s26
      %s28 = sshll.u32 [#allocation2], 4
      %s29 = int_to_ptr.vmem [resolvable:$true] %s28
      %34 = dma.hbm_to_vmem [thread:$0]  %s27, 256, %s29, [#allocation3], 128, 128, 8
    $region5: #{run.1} parent=1 // pred_fallthru
      _
    // Predicated region
    $region6: #{run.1} parent=1 // pred_check
      _
    $region7: #{run.1} parent=1 // pred_check_branch
      %36 = sbr.rel (0) target = $region9
    $region8: #{run.1} parent=1 // pred_region
      %38 = vsyncadd [#allocation6], 0
      %s39 = sshll.u32 %s1, 4
      %s40 = int_to_ptr.hbm [resolvable:$true] %s39
      %s41 = sshll.u32 [#allocation5], 4
      %s42 = int_to_ptr.vmem [resolvable:$true] %s41
      %47 = dma.hbm_to_vmem [thread:$0]  %s40, 384, %s42, [#allocation6], 128, 128, 8
    $region9: #{run.1} parent=1 // pred_fallthru
      _
    // Predicated region
    $region10: #{run.1} parent=1 // pred_check
      _
    $region11: #{run.1} parent=1 // pred_check_branch
      %49 = sbr.rel (0) target = $region13
    $region12: #{run.1} parent=1 // pred_region
      %51 = vsyncadd [#allocation6], 0
      %s52 = sshll.u32 %s2, 4
      %s53 = int_to_ptr.hbm [resolvable:$true] %s52
      %s54 = sshll.u32 [#allocation7], 4
      %s55 = int_to_ptr.vmem [resolvable:$true] %s54
      %60 = dma.hbm_to_vmem [thread:$0]  %s53, 256, %s55, [#allocation6], 128, 128, 8
    $region13: #{run.1} parent=1 // pred_fallthru
      _
    // Predicated region
    $region14: #{run.1} parent=1 // pred_check
      _
    $region15: #{run.1} parent=1 // pred_check_branch
      %62 = sbr.rel (0) target = $region17
    $region16: #{run.1} parent=1 // pred_region
      %64 = vsyncadd [#allocation9], 0
      %s65 = sshll.u32 %s3, 4
      %s66 = int_to_ptr.hbm [resolvable:$true] %s65
      %s67 = sshll.u32 [#allocation8], 4
      %s68 = int_to_ptr.vmem [resolvable:$true] %s67
      %73 = dma.hbm_to_vmem [thread:$0]  %s66, 256, %s68, [#allocation9], 128, 128, 8
    $region17: #{run.1} parent=1 // pred_fallthru
      _
    // Predicated region
    $region18: #{run.1} parent=1 // pred_check
      _
    $region19: #{run.1} parent=1 // pred_check_branch
      %75 = sbr.rel (0) target = $region21
    $region20: #{run.1} parent=1 // pred_region
      %77 = vsyncadd [#allocation9], 0
      %s78 = sshll.u32 %s4, 4
      %s79 = int_to_ptr.hbm [resolvable:$true] %s78
      %s80 = sshll.u32 [#allocation10], 4
      %s81 = int_to_ptr.vmem [resolvable:$true] %s80
      %86 = dma.hbm_to_vmem [thread:$0]  %s79, 256, %s81, [#allocation9], 128, 128, 8
    $region21: #{run.1} parent=1 // pred_fallthru
      _
    // Predicated region
    $region22: #{run.1} parent=1 // pred_check
      _
    $region23: #{run.1} parent=1 // pred_check_branch
      %88 = sbr.rel (0) target = $region25
    $region24: #{run.1} parent=1 // pred_region
      %90 = vsyncadd [#allocation12], 0
      %s91 = sshll.u32 %s5, 4
      %s92 = int_to_ptr.hbm [resolvable:$true] %s91
      %s93 = sshll.u32 [#allocation11], 4
      %s94 = int_to_ptr.vmem [resolvable:$true] %s93
      %99 = dma.hbm_to_vmem [thread:$0]  %s92, 256, %s94, [#allocation12], 128, 128, 8
    $region25: #{run.1} parent=1 // pred_fallthru
      _
    // Predicated region
    $region26: #{run.1} parent=1 // pred_check
      _
    $region27: #{run.1} parent=1 // pred_check_branch
      %101 = sbr.rel (0) target = $region29
    $region28: #{run.1} parent=1 // pred_region
      %103 = vsyncadd [#allocation12], 0
      %s104 = sshll.u32 %s6, 4
      %s105 = int_to_ptr.hbm [resolvable:$true] %s104
      %s106 = sshll.u32 [#allocation13], 4
      %s107 = int_to_ptr.vmem [resolvable:$true] %s106
      %112 = dma.hbm_to_vmem [thread:$0]  %s105, 256, %s107, [#allocation12], 128, 128, 8
    $region29: #{run.1} parent=1 // pred_fallthru
      _
    // Predicated region
    $region30: #{run.1} parent=1 // pred_check
      _
    $region31: #{run.1} parent=1 // pred_check_branch
      %114 = sbr.rel (0) target = $region33
    $region32: #{run.1} parent=1 // pred_region
      %116 = vsyncadd [#allocation15], 0
      %s117 = sshll.u32 %s7, 4
      %s118 = int_to_ptr.hbm [resolvable:$true] %s117
      %s119 = sshll.u32 [#allocation14], 4
      %s120 = int_to_ptr.vmem [resolvable:$true] %s119
      %125 = dma.hbm_to_vmem [thread:$0]  %s118, 6144, %s120, [#allocation15], 128, 128, 8
    $region33: #{run.1} parent=1 // pred_fallthru
      _
    // Predicated region
    $region34: #{run.1} parent=1 // pred_check
      _
    $region35: #{run.1} parent=1 // pred_check_branch
      %127 = sbr.rel (0) target = $region37
    $region36: #{run.1} parent=1 // pred_region
      _
    $region37: #{run.1} parent=1 // pred_fallthru
      _
    // Predicated region
    $region38: #{run.1} parent=1 // pred_check
      _
    $region39: #{run.1} parent=1 // pred_check_branch
      %129 = sbr.rel (0) target = $region41
    $region40: #{run.1} parent=1 // pred_region
      _
    $region41: #{run.1} parent=1 // pred_fallthru
      _
    // Predicated region
    $region42: #{run.1} parent=1 // pred_check
      _
    $region43: #{run.1} parent=1 // pred_check_branch
      %131 = sbr.rel (0) target = $region45
    $region44: #{run.1} parent=1 // pred_region
      _
    $region45: #{run.1} parent=1 // pred_fallthru
      _
    // Predicated region
    $region46: #{run.1} parent=1 // pred_check
      _
    $region47: #{run.1} parent=1 // pred_check_branch
      %133 = sbr.rel (0) target = $region49
    $region48: #{run.1} parent=1 // pred_region
      %135 = dma.done [#allocation3], 256
    $region49: #{run.1} parent=1 // pred_fallthru
      _
    // Predicated region
    $region50: #{run.1} parent=1 // pred_check
      _
    $region51: #{run.1} parent=1 // pred_check_branch
      %137 = sbr.rel (0) target = $region53
    $region52: #{run.1} parent=1 // pred_region
      %139 = dma.done [#allocation6], 384
    $region53: #{run.1} parent=1 // pred_fallthru
      _
    // Predicated region
    $region54: #{run.1} parent=1 // pred_check
      _
    $region55: #{run.1} parent=1 // pred_check_branch
      %141 = sbr.rel (0) target = $region57
    $region56: #{run.1} parent=1 // pred_region
      %143 = dma.done [#allocation6], 256
    $region57: #{run.1} parent=1 // pred_fallthru
      _
    // Predicated region
    $region58: #{run.1} parent=1 // pred_check
      _
    $region59: #{run.1} parent=1 // pred_check_branch
      %145 = sbr.rel (0) target = $region61
    $region60: #{run.1} parent=1 // pred_region
      %147 = dma.done [#allocation9], 256
    $region61: #{run.1} parent=1 // pred_fallthru
      _
    // Predicated region
    $region62: #{run.1} parent=1 // pred_check
      _
    $region63: #{run.1} parent=1 // pred_check_branch
      %149 = sbr.rel (0) target = $region65
    $region64: #{run.1} parent=1 // pred_region
      %151 = dma.done [#allocation9], 256
    $region65: #{run.1} parent=1 // pred_fallthru
      _
    // Predicated region
    $region66: #{run.1} parent=1 // pred_check
      _
    $region67: #{run.1} parent=1 // pred_check_branch
      %153 = sbr.rel (0) target = $region69
    $region68: #{run.1} parent=1 // pred_region
      %155 = dma.done [#allocation12], 256
    $region69: #{run.1} parent=1 // pred_fallthru
      _
    // Predicated region
    $region70: #{run.1} parent=1 // pred_check
      _
    $region71: #{run.1} parent=1 // pred_check_branch
      %157 = sbr.rel (0) target = $region73
    $region72: #{run.1} parent=1 // pred_region
      %159 = dma.done [#allocation12], 256
    $region73: #{run.1} parent=1 // pred_fallthru
      _
    // Predicated region
    $region74: #{run.1} parent=1 // pred_check
      _
    $region75: #{run.1} parent=1 // pred_check_branch
      %161 = sbr.rel (0) target = $region77
    $region76: #{run.1} parent=1 // pred_region
      %163 = dma.done [#allocation15], 6144
    $region77: #{run.1} parent=1 // pred_fallthru
      _
    %v164 = vld [vmem:[#allocation2] sm:$0xff]
    %v165 = vld [vmem:[#allocation2 + $0x8] sm:$0xff]
    %v166 = vld [vmem:[#allocation5] sm:$0xff]
    %v167 = vld [vmem:[#allocation5 + $0x8] sm:$0xff]
    %v168 = vld [vmem:[#allocation5 + $0x10] sm:$0xff]
    %vm169 = vcmask 195584
    %v171 = vsel %vm169, %v164, 0
    %v174 = vsel %vm169, %v165, 0
    %176 = vmatpush.msra.mxu0 0.0
    %177 = vmatpush.msra.mxu0 0.0
    %178 = vmatpush.msra.mxu0 0.0
    %179 = vmatpush.msra.mxu0 0.0
    %180 = vmatpush.msra.mxu0 0.0
    %181 = vmatpush.msra.mxu0 0.0
    %182 = vmatpush.msra.mxu0 0.0
    %183 = vmatpush.msra.mxu0 0.0
    %184 = vmatpush.msra.mxu0 0.0
    %185 = vmatpush.msra.mxu0 0.0
    %186 = vmatpush.msra.mxu0 0.0
    %187 = vmatpush.msra.mxu0 0.0
    %188 = vmatpush.msra.mxu0 0.0
    %189 = vmatpush.msra.mxu0 %v168
    %190 = vmatpush.msra.mxu0 %v167
    %191 = vmatpush.msra.mxu0 %v166
    %192 = vmatmul.f32.gmra.mxu0 %v171
    %v193 = vpop.f32.mrf.mxu0
    %v194 = vadd.f32 0.0, %v193
    %195 = vmatmul.f32.gmra.mxu0 %v174
    %v196 = vpop.f32.mrf.mxu0
    %v197 = vadd.f32 0.0, %v196
    %198 = vdwg.mxu0
    %vm199 = vcmask 392192
    %v201 = vsel %vm199, %v194, 0
    %v204 = vsel %vm199, %v197, 0
    %206 = vmatpush.xpose.msra.mxu0 0.0
    %207 = vmatpush.xpose.msra.mxu0 0.0
    %208 = vmatpush.xpose.msra.mxu0 0.0
    %209 = vmatpush.xpose.msra.mxu0 0.0
    %210 = vmatpush.xpose.msra.mxu0 0.0
    %211 = vmatpush.xpose.msra.mxu0 0.0
    %212 = vmatpush.xpose.msra.mxu0 0.0
    %213 = vmatpush.xpose.msra.mxu0 0.0
    %214 = vmatpush.xpose.msra.mxu0 0.0
    %215 = vmatpush.xpose.msra.mxu0 0.0
    %216 = vmatpush.xpose.msra.mxu0 0.0
    %217 = vmatpush.xpose.msra.mxu0 0.0
    %218 = vmatpush.xpose.msra.mxu0 0.0
    %219 = vmatpush.xpose.msra.mxu0 0.0
    %220 = vmatpush.xpose.msra.mxu0 %v204
    %221 = vmatpush.xpose.msra.mxu0 %v201
    %222 = vmatmul.f32.gmra.mxu0 %v201
    %v223 = vpop.f32.mrf.mxu0
    %v224 = vadd.f32 0.0, %v223
    %225 = vmatmul.f32.gmra.mxu0 %v204
    %v226 = vpop.f32.mrf.mxu0
    %v227 = vadd.f32 0.0, %v226
    %228 = vdwg.mxu0
    %v229 = vld [vmem:[#allocation7] sm:$0xff]
    %v230 = vld [vmem:[#allocation7 + $0x8] sm:$0xff]
    %v231 = vmul.f32 %v224, %v229
    %v232 = vmul.f32 %v227, %v230
    %vm233 = vcmask 130048
    %v234 = vsel %vm233, %v231, 0.0
    %235 = vadd.xlane.f32.xlu0 %v234
    %v236 = vpop.xlane.xlu0 %235
    %v237 = vsel %vm233, %v232, 0.0
    %238 = vadd.xlane.f32.xlu0 %v237
    %v239 = vpop.xlane.xlu0 %238
    %v240 = vadd.f32 %v234, %v237
    %v241 = vrot.slane %v240, 4
    %v242 = vadd.f32 %v240, %v241
    %v243 = vrot.slane %v242, 2
    %v244 = vadd.f32 %v242, %v243
    %v245 = vrot.slane %v244, 1
    %v246 = vadd.f32 %v244, %v245
    %v247 = vadd.f32 %v236, %v246
    %v248 = vadd.f32 %v239, %v246
    %v249 = vmul.f32 %v224, 2.0
    %v250 = vmul.f32 %v227, 2.0
    %v251 = vsub.f32 %v247, %v249
    %v252 = vsub.f32 %v248, %v250
    %v253 = vmax.f32 %v251, 1e-12
    %v254 = vmax.f32 %v252, 1e-12
    %v255 = vrsqrt.pop %v253
    %v256 = vmul.f32 %v255, %v253
    %v257 = vmul.f32 %v256, %v255
    %v258 = vmul.f32 0.5, %v257
    %v259 = vsub.f32 1.5, %v258
    %v260 = vmul.f32 %v255, %v259
    %v261 = vmul.f32 %v253, %v260
    %vm262 = vcmp.eq.f32.partialorder %v253, inf
    %v263 = vsel %vm262, %v253, %v261
    %vm264 = vcmp.eq.f32.partialorder %v253, 0.0
    %v265 = vand.u32 %v253, 2147483648
    %v266 = vsel %vm264, %v265, %v263
    %v267 = vrsqrt.pop %v254
    %v268 = vmul.f32 %v267, %v254
    %v269 = vmul.f32 %v268, %v267
    %v270 = vmul.f32 0.5, %v269
    %v271 = vsub.f32 1.5, %v270
    %v272 = vmul.f32 %v267, %v271
    %v273 = vmul.f32 %v254, %v272
    %vm274 = vcmp.eq.f32.partialorder %v254, inf
    %v275 = vsel %vm274, %v254, %v273
    %vm276 = vcmp.eq.f32.partialorder %v254, 0.0
    %v277 = vand.u32 %v254, 2147483648
    %v278 = vsel %vm276, %v277, %v275
    %v279 = vld [vmem:[#allocation8] sm:$0xff]
    %v280 = vld [vmem:[#allocation8 + $0x8] sm:$0xff]
    %vm281 = vcmp.gt.f32.partialorder %v279, 0.5
    %vm282 = vcmp.gt.f32.partialorder %v280, 0.5
    %v283 = vld [vmem:[#allocation10] sm:$0xff]
    %v284 = vld [vmem:[#allocation10 + $0x8] sm:$0xff]
    %vm285 = vcmp.gt.f32.partialorder %v283, 0.5
    %vm286 = vcmp.gt.f32.partialorder %v284, 0.5
    %v287 = vld [vmem:[#allocation11] sm:$0xff]
    %v288 = vld [vmem:[#allocation11 + $0x8] sm:$0xff]
    %v289 = vsel %vm281, %v266, -1e+30
    %v290 = vsel %vm282, %v278, -1e+30
    %v291 = vsel %vm233, %v289, -inf
    %292 = vmax.xlane.f32.xlu0 %v291
    %v293 = vpop.xlane.xlu0 %292
    %v294 = vsel %vm233, %v290, -inf
    %295 = vmax.xlane.f32.xlu0 %v294
    %v296 = vpop.xlane.xlu0 %295
    %v297 = vsel %vm285, %v266, 1e+30
    %v298 = vsel %vm286, %v278, 1e+30
    %v299 = vsel %vm233, %v297, inf
    %300 = vmin.xlane.f32.xlu0 %v299
    %v301 = vpop.xlane.xlu0 %300
    %v302 = vsel %vm233, %v298, inf
    %303 = vmin.xlane.f32.xlu0 %v302
    %v304 = vpop.xlane.xlu0 %303
    %vm305 = vcmp.eq.f32.partialorder %v266, %v293
    %vm306 = vcmp.eq.f32.partialorder %v278, %v296
    %vm307 = vmand %vm281, %vm305
    %vm308 = vmand %vm282, %vm306
    %vm309 = vcmp.eq.f32.partialorder %v266, %v301
    %vm310 = vcmp.eq.f32.partialorder %v278, %v304
    %vm311 = vmand %vm285, %vm309
    %vm312 = vmand %vm286, %vm310
    %v313 = vsel %vm307, %v287, 16.0
    %v314 = vsel %vm308, %v288, 16.0
    %v315 = vsel %vm233, %v313, inf
    %316 = vmin.xlane.f32.xlu0 %v315
    %v317 = vpop.xlane.xlu0 %316
    %v318 = vsel %vm233, %v314, inf
    %319 = vmin.xlane.f32.xlu0 %v318
    %v320 = vpop.xlane.xlu0 %319
    %v321 = vsel %vm311, %v287, 16.0
    %v322 = vsel %vm312, %v288, 16.0
    %v323 = vsel %vm233, %v321, inf
    %324 = vmin.xlane.f32.xlu0 %v323
    %v325 = vpop.xlane.xlu0 %324
    %v326 = vsel %vm233, %v322, inf
    %327 = vmin.xlane.f32.xlu0 %v326
    %v328 = vpop.xlane.xlu0 %327
    %vm329 = vcmp.eq.f32.partialorder %v287, %v317
    %vm330 = vcmp.eq.f32.partialorder %v288, %v320
    %v331 = vsel %vm329, 1, 0
    %v332 = vsel %vm330, 1, 0
    %v333 = vcvt.s32.f32 %v331
    %v334 = vcvt.s32.f32 %v332
    %vm335 = vcmp.eq.f32.partialorder %v287, %v325
    %vm336 = vcmp.eq.f32.partialorder %v288, %v328
    %v337 = vsel %vm335, 1, 0
    %v338 = vsel %vm336, 1, 0
    %v339 = vcvt.s32.f32 %v337
    %v340 = vcvt.s32.f32 %v338
    %v342 = vsel %vm233, %v333, 0
    %v345 = vsel %vm233, %v334, 0
    %v348 = vsel %vm233, %v339, 0
    %v351 = vsel %vm233, %v340, 0
    %353 = vmatpush.msra.mxu0 0.0
    %354 = vmatpush.msra.mxu0 0.0
    %355 = vmatpush.msra.mxu0 0.0
    %356 = vmatpush.msra.mxu0 0.0
    %357 = vmatpush.msra.mxu0 0.0
    %358 = vmatpush.msra.mxu0 0.0
    %359 = vmatpush.msra.mxu0 0.0
    %360 = vmatpush.msra.mxu0 0.0
    %361 = vmatpush.msra.mxu0 0.0
    %362 = vmatpush.msra.mxu0 0.0
    %363 = vmatpush.msra.mxu0 0.0
    %364 = vmatpush.msra.mxu0 0.0
    %365 = vmatpush.msra.mxu0 0.0
    %366 = vmatpush.msra.mxu0 0.0
    %367 = vmatpush.msra.mxu0 %v197
    %368 = vmatpush.msra.mxu0 %v194
    %369 = vmatmul.f32.gmra.mxu0 %v342
    %v370 = vpop.f32.mrf.mxu0
    %v371 = vadd.f32 0.0, %v370
    %372 = vmatmul.f32.gmra.mxu0 %v345
    %v373 = vpop.f32.mrf.mxu0
    %v374 = vadd.f32 0.0, %v373
    %375 = vmatmul.f32.gmra.mxu0 %v348
    %v376 = vpop.f32.mrf.mxu0
    %v377 = vadd.f32 0.0, %v376
    %378 = vmatmul.f32.gmra.mxu0 %v351
    %v379 = vpop.f32.mrf.mxu0
    %v380 = vadd.f32 0.0, %v379
    %381 = vdwg.mxu0
    %386 = vrot.lane.b32.xlu0 %v371, 48
    %v387 = vpop.permute.xlu0 %386
    %388 = vrot.lane.b32.xlu0 %v374, 48
    %v389 = vpop.permute.xlu0 %388
    %390 = vrot.lane.b32.xlu0 %v377, 48
    %v391 = vpop.permute.xlu0 %390
    %392 = vrot.lane.b32.xlu0 %v380, 48
    %v393 = vpop.permute.xlu0 %392
    %v398 = vsel %vm199, %v371, %v387
    %v399 = vsel %vm199, %v374, %v389
    %v400 = vsel %vm199, %v377, %v391
    %v401 = vsel %vm199, %v380, %v393
    %v402 = vmul.f32 %v194, %v194
    %v403 = vmul.f32 %v197, %v197
    %v404 = vmul.f32 %v371, %v371
    %v405 = vmul.f32 %v374, %v374
    %v406 = vmul.f32 %v377, %v377
    %v407 = vmul.f32 %v380, %v380
    %v408 = vmul.f32 %v194, %v398
    %v409 = vmul.f32 %v197, %v399
    %v410 = vmul.f32 %v194, %v400
    %v411 = vmul.f32 %v197, %v401
    %416 = vrot.lane.b32.xlu0 %v398, 120
    %v417 = vpop.permute.xlu0 %416
    %418 = vrot.lane.b32.xlu0 %v399, 120
    %v419 = vpop.permute.xlu0 %418
    %420 = vrot.lane.b32.xlu0 %v400, 120
    %v421 = vpop.permute.xlu0 %420
    %422 = vrot.lane.b32.xlu0 %v401, 120
    %v423 = vpop.permute.xlu0 %422
    %v428 = vmul.f32 %v194, %v417
    %v429 = vmul.f32 %v197, %v419
    %v430 = vmul.f32 %v194, %v421
    %v431 = vmul.f32 %v197, %v423
    %432 = vrot.lane.b32.xlu0 %v398, 112
    %v433 = vpop.permute.xlu0 %432
    %434 = vrot.lane.b32.xlu0 %v399, 112
    %v435 = vpop.permute.xlu0 %434
    %436 = vrot.lane.b32.xlu0 %v400, 112
    %v437 = vpop.permute.xlu0 %436
    %438 = vrot.lane.b32.xlu0 %v401, 112
    %v439 = vpop.permute.xlu0 %438
    %v444 = vmul.f32 %v194, %v433
    %v445 = vmul.f32 %v197, %v435
    %v446 = vmul.f32 %v194, %v437
    %v447 = vmul.f32 %v197, %v439
    %448 = vrot.lane.b32.xlu0 %v398, 104
    %v449 = vpop.permute.xlu0 %448
    %450 = vrot.lane.b32.xlu0 %v399, 104
    %v451 = vpop.permute.xlu0 %450
    %452 = vrot.lane.b32.xlu0 %v400, 104
    %v453 = vpop.permute.xlu0 %452
    %454 = vrot.lane.b32.xlu0 %v401, 104
    %v455 = vpop.permute.xlu0 %454
    %v460 = vmul.f32 %v194, %v449
    %v461 = vmul.f32 %v197, %v451
    %v462 = vmul.f32 %v194, %v453
    %v463 = vmul.f32 %v197, %v455
    %464 = vrot.lane.b32.xlu0 %v398, 96
    %v465 = vpop.permute.xlu0 %464
    %466 = vrot.lane.b32.xlu0 %v399, 96
    %v467 = vpop.permute.xlu0 %466
    %468 = vrot.lane.b32.xlu0 %v400, 96
    %v469 = vpop.permute.xlu0 %468
    %470 = vrot.lane.b32.xlu0 %v401, 96
    %v471 = vpop.permute.xlu0 %470
    %v476 = vmul.f32 %v194, %v465
    %v477 = vmul.f32 %v197, %v467
    %v478 = vmul.f32 %v194, %v469
    %v479 = vmul.f32 %v197, %v471
    %480 = vrot.lane.b32.xlu0 %v398, 88
    %v481 = vpop.permute.xlu0 %480
    %482 = vrot.lane.b32.xlu0 %v399, 88
    %v483 = vpop.permute.xlu0 %482
    %484 = vrot.lane.b32.xlu0 %v400, 88
    %v485 = vpop.permute.xlu0 %484
    %486 = vrot.lane.b32.xlu0 %v401, 88
    %v487 = vpop.permute.xlu0 %486
    %v492 = vmul.f32 %v194, %v481
    %v493 = vmul.f32 %v197, %v483
    %v494 = vmul.f32 %v194, %v485
    %v495 = vmul.f32 %v197, %v487
    %500 = vrot.lane.b32.xlu0 %v404, 48
    %v501 = vpop.permute.xlu0 %500
    %502 = vrot.lane.b32.xlu0 %v405, 48
    %v503 = vpop.permute.xlu0 %502
    %504 = vrot.lane.b32.xlu0 %v406, 48
    %v505 = vpop.permute.xlu0 %504
    %506 = vrot.lane.b32.xlu0 %v407, 48
    %v507 = vpop.permute.xlu0 %506
    %516 = vrot.lane.b32.xlu0 %v408, 96
    %v517 = vpop.permute.xlu0 %516
    %518 = vrot.lane.b32.xlu0 %v409, 96
    %v519 = vpop.permute.xlu0 %518
    %520 = vrot.lane.b32.xlu0 %v410, 96
    %v521 = vpop.permute.xlu0 %520
    %522 = vrot.lane.b32.xlu0 %v411, 96
    %v523 = vpop.permute.xlu0 %522
    %532 = vrot.lane.b32.xlu0 %v428, 16
    %v533 = vpop.permute.xlu0 %532
    %534 = vrot.lane.b32.xlu0 %v429, 16
    %v535 = vpop.permute.xlu0 %534
    %536 = vrot.lane.b32.xlu0 %v430, 16
    %v537 = vpop.permute.xlu0 %536
    %538 = vrot.lane.b32.xlu0 %v431, 16
    %v539 = vpop.permute.xlu0 %538
    %548 = vrot.lane.b32.xlu0 %v444, 64
    %v549 = vpop.permute.xlu0 %548
    %550 = vrot.lane.b32.xlu0 %v445, 64
    %v551 = vpop.permute.xlu0 %550
    %552 = vrot.lane.b32.xlu0 %v446, 64
    %v553 = vpop.permute.xlu0 %552
    %554 = vrot.lane.b32.xlu0 %v447, 64
    %v555 = vpop.permute.xlu0 %554
    %564 = vrot.lane.b32.xlu0 %v460, 112
    %v565 = vpop.permute.xlu0 %564
    %566 = vrot.lane.b32.xlu0 %v461, 112
    %v567 = vpop.permute.xlu0 %566
    %568 = vrot.lane.b32.xlu0 %v462, 112
    %v569 = vpop.permute.xlu0 %568
    %570 = vrot.lane.b32.xlu0 %v463, 112
    %v571 = vpop.permute.xlu0 %570
    %580 = vrot.lane.b32.xlu0 %v476, 32
    %v581 = vpop.permute.xlu0 %580
    %582 = vrot.lane.b32.xlu0 %v477, 32
    %v583 = vpop.permute.xlu0 %582
    %584 = vrot.lane.b32.xlu0 %v478, 32
    %v585 = vpop.permute.xlu0 %584
    %586 = vrot.lane.b32.xlu0 %v479, 32
    %v587 = vpop.permute.xlu0 %586
    %596 = vrot.lane.b32.xlu0 %v492, 80
    %v597 = vpop.permute.xlu0 %596
    %598 = vrot.lane.b32.xlu0 %v493, 80
    %v599 = vpop.permute.xlu0 %598
    %600 = vrot.lane.b32.xlu0 %v494, 80
    %v601 = vpop.permute.xlu0 %600
    %602 = vrot.lane.b32.xlu0 %v495, 80
    %v603 = vpop.permute.xlu0 %602
    %v608 = vsel %vm199, %v402, %v501
    %v609 = vsel %vm199, %v403, %v503
    %v610 = vsel %vm199, %v402, %v505
    %v611 = vsel %vm199, %v403, %v507
    %vm612 = vcmask 785408
    %v613 = vsel %vm612, %v608, %v517
    %v614 = vsel %vm612, %v609, %v519
    %v615 = vsel %vm612, %v610, %v521
    %v616 = vsel %vm612, %v611, %v523
    %v617 = vsel %vm233, %v517, %v533
    %v618 = vsel %vm233, %v519, %v535
    %v619 = vsel %vm233, %v521, %v537
    %v620 = vsel %vm233, %v523, %v539
    %vm621 = vcmask 523264
    %v622 = vsel %vm621, %v617, %v549
    %v623 = vsel %vm621, %v618, %v551
    %v624 = vsel %vm621, %v619, %v553
    %v625 = vsel %vm621, %v620, %v555
    %vm626 = vcmask 916480
    %v627 = vsel %vm626, %v622, %v565
    %v628 = vsel %vm626, %v623, %v567
    %v629 = vsel %vm626, %v624, %v569
    %v630 = vsel %vm626, %v625, %v571
    %vm631 = vcmask 261120
    %v632 = vsel %vm631, %v565, %v581
    %v633 = vsel %vm631, %v567, %v583
    %v634 = vsel %vm631, %v569, %v585
    %v635 = vsel %vm631, %v571, %v587
    %vm636 = vcmask 654336
    %v637 = vsel %vm636, %v632, %v597
    %v638 = vsel %vm636, %v633, %v599
    %v639 = vsel %vm636, %v634, %v601
    %v640 = vsel %vm636, %v635, %v603
    %v641 = vld [vmem:[#allocation14] sm:$0xff]
    %v642 = vld [vmem:[#allocation14 + $0x8] sm:$0xff]
    %v643 = vld [vmem:[#allocation14 + $0x10] sm:$0xff]
    %v644 = vld [vmem:[#allocation14 + $0x18] sm:$0xff]
    %v645 = vld [vmem:[#allocation14 + $0x20] sm:$0xff]
    %v646 = vld [vmem:[#allocation14 + $0x28] sm:$0xff]
    %v647 = vld [vmem:[#allocation14 + $0x30] sm:$0xff]
    %v648 = vld [vmem:[#allocation14 + $0x38] sm:$0xff]
    %v649 = vld [vmem:[#allocation14 + $0x40] sm:$0xff]
    %v650 = vld [vmem:[#allocation14 + $0x48] sm:$0xff]
    %v651 = vld [vmem:[#allocation14 + $0x50] sm:$0xff]
    %v652 = vld [vmem:[#allocation14 + $0x58] sm:$0xff]
    %v653 = vld [vmem:[#allocation14 + $0x60] sm:$0xff]
    %v654 = vld [vmem:[#allocation14 + $0x68] sm:$0xff]
    %v655 = vld [vmem:[#allocation14 + $0x70] sm:$0xff]
    %v656 = vld [vmem:[#allocation14 + $0x78] sm:$0xff]
    %v657 = vld [vmem:[#allocation14 + $0x80] sm:$0xff]
    %v658 = vld [vmem:[#allocation14 + $0x88] sm:$0xff]
    %v659 = vld [vmem:[#allocation14 + $0x90] sm:$0xff]
    %v660 = vld [vmem:[#allocation14 + $0x98] sm:$0xff]
    %v661 = vld [vmem:[#allocation14 + $0xa0] sm:$0xff]
    %v662 = vld [vmem:[#allocation14 + $0xa8] sm:$0xff]
    %v663 = vld [vmem:[#allocation14 + $0xb0] sm:$0xff]
    %v664 = vld [vmem:[#allocation14 + $0xb8] sm:$0xff]
    %v665 = vld [vmem:[#allocation14 + $0xc0] sm:$0xff]
    %v666 = vld [vmem:[#allocation14 + $0xc8] sm:$0xff]
    %v667 = vld [vmem:[#allocation14 + $0xd0] sm:$0xff]
    %v668 = vld [vmem:[#allocation14 + $0xd8] sm:$0xff]
    %v669 = vld [vmem:[#allocation14 + $0xe0] sm:$0xff]
    %v670 = vld [vmem:[#allocation14 + $0xe8] sm:$0xff]
    %v671 = vld [vmem:[#allocation14 + $0xf0] sm:$0xff]
    %v672 = vld [vmem:[#allocation14 + $0xf8] sm:$0xff]
    %v673 = vld [vmem:[#allocation14 + $0x100] sm:$0xff]
    %v674 = vld [vmem:[#allocation14 + $0x108] sm:$0xff]
    %v675 = vld [vmem:[#allocation14 + $0x110] sm:$0xff]
    %v676 = vld [vmem:[#allocation14 + $0x118] sm:$0xff]
    %v677 = vld [vmem:[#allocation14 + $0x120] sm:$0xff]
    %v678 = vld [vmem:[#allocation14 + $0x128] sm:$0xff]
    %v679 = vld [vmem:[#allocation14 + $0x130] sm:$0xff]
    %v680 = vld [vmem:[#allocation14 + $0x138] sm:$0xff]
    %v681 = vld [vmem:[#allocation14 + $0x140] sm:$0xff]
    %v682 = vld [vmem:[#allocation14 + $0x148] sm:$0xff]
    %v683 = vld [vmem:[#allocation14 + $0x150] sm:$0xff]
    %v684 = vld [vmem:[#allocation14 + $0x158] sm:$0xff]
    %v685 = vld [vmem:[#allocation14 + $0x160] sm:$0xff]
    %v686 = vld [vmem:[#allocation14 + $0x168] sm:$0xff]
    %v687 = vld [vmem:[#allocation14 + $0x170] sm:$0xff]
    %v688 = vld [vmem:[#allocation14 + $0x178] sm:$0xff]
    %689 = vmatpush.msra.mxu0 %v656
    %690 = vmatpush.msra.mxu0 %v655
    %691 = vmatpush.msra.mxu0 %v654
    %692 = vmatpush.msra.mxu0 %v653
    %693 = vmatpush.msra.mxu0 %v652
    %694 = vmatpush.msra.mxu0 %v651
    %695 = vmatpush.msra.mxu0 %v650
    %696 = vmatpush.msra.mxu0 %v649
    %697 = vmatpush.msra.mxu0 %v648
    %698 = vmatpush.msra.mxu0 %v647
    %699 = vmatpush.msra.mxu0 %v646
    %700 = vmatpush.msra.mxu0 %v645
    %701 = vmatpush.msra.mxu0 %v644
    %702 = vmatpush.msra.mxu0 %v643
    %703 = vmatpush.msra.mxu0 %v642
    %704 = vmatpush.msra.mxu0 %v641
    %705 = vmatmul.f32.gmra.mxu0 %v613
    %v706 = vpop.f32.mrf.mxu0
    %v707 = vadd.f32 0.0, %v706
    %708 = vmatmul.f32.gmra.mxu0 %v614
    %v709 = vpop.f32.mrf.mxu0
    %v710 = vadd.f32 0.0, %v709
    %711 = vmatmul.f32.gmra.mxu0 %v615
    %v712 = vpop.f32.mrf.mxu0
    %v713 = vadd.f32 0.0, %v712
    %714 = vmatmul.f32.gmra.mxu0 %v616
    %v715 = vpop.f32.mrf.mxu0
    %v716 = vadd.f32 0.0, %v715
    %717 = vdwg.mxu0
    %718 = vmatpush.msra.mxu0 %v672
    %719 = vmatpush.msra.mxu0 %v671
    %720 = vmatpush.msra.mxu0 %v670
    %721 = vmatpush.msra.mxu0 %v669
    %722 = vmatpush.msra.mxu0 %v668
    %723 = vmatpush.msra.mxu0 %v667
    %724 = vmatpush.msra.mxu0 %v666
    %725 = vmatpush.msra.mxu0 %v665
    %726 = vmatpush.msra.mxu0 %v664
    %727 = vmatpush.msra.mxu0 %v663
    %728 = vmatpush.msra.mxu0 %v662
    %729 = vmatpush.msra.mxu0 %v661
    %730 = vmatpush.msra.mxu0 %v660
    %731 = vmatpush.msra.mxu0 %v659
    %732 = vmatpush.msra.mxu0 %v658
    %733 = vmatpush.msra.mxu0 %v657
    %734 = vmatmul.f32.gmra.mxu0 %v627
    %v735 = vpop.f32.mrf.mxu0
    %v736 = vadd.f32 %v707, %v735
    %737 = vmatmul.f32.gmra.mxu0 %v628
    %v738 = vpop.f32.mrf.mxu0
    %v739 = vadd.f32 %v710, %v738
    %740 = vmatmul.f32.gmra.mxu0 %v629
    %v741 = vpop.f32.mrf.mxu0
    %v742 = vadd.f32 %v713, %v741
    %743 = vmatmul.f32.gmra.mxu0 %v630
    %v744 = vpop.f32.mrf.mxu0
    %v745 = vadd.f32 %v716, %v744
    %746 = vdwg.mxu0
    %747 = vmatpush.msra.mxu0 %v688
    %748 = vmatpush.msra.mxu0 %v687
    %749 = vmatpush.msra.mxu0 %v686
    %750 = vmatpush.msra.mxu0 %v685
    %751 = vmatpush.msra.mxu0 %v684
    %752 = vmatpush.msra.mxu0 %v683
    %753 = vmatpush.msra.mxu0 %v682
    %754 = vmatpush.msra.mxu0 %v681
    %755 = vmatpush.msra.mxu0 %v680
    %756 = vmatpush.msra.mxu0 %v679
    %757 = vmatpush.msra.mxu0 %v678
    %758 = vmatpush.msra.mxu0 %v677
    %759 = vmatpush.msra.mxu0 %v676
    %760 = vmatpush.msra.mxu0 %v675
    %761 = vmatpush.msra.mxu0 %v674
    %762 = vmatpush.msra.mxu0 %v673
    %763 = vmatmul.f32.gmra.mxu0 %v637
    %v764 = vpop.f32.mrf.mxu0
    %v765 = vadd.f32 %v736, %v764
    %766 = vmatmul.f32.gmra.mxu0 %v638
    %v767 = vpop.f32.mrf.mxu0
    %v768 = vadd.f32 %v739, %v767
    %769 = vmatmul.f32.gmra.mxu0 %v639
    %v770 = vpop.f32.mrf.mxu0
    %v771 = vadd.f32 %v742, %v770
    %772 = vmatmul.f32.gmra.mxu0 %v640
    %v773 = vpop.f32.mrf.mxu0
    %v774 = vadd.f32 %v745, %v773
    %775 = vdwg.mxu0
    %v776 = vmax.f32 %v765, 1e-12
    %v777 = vmax.f32 %v768, 1e-12
    %v778 = vmax.f32 %v771, 1e-12
    %v779 = vmax.f32 %v774, 1e-12
    %v780 = vrsqrt.pop %v776
    %v781 = vmul.f32 %v780, %v776
    %v782 = vmul.f32 %v781, %v780
    %v783 = vmul.f32 0.5, %v782
    %v784 = vsub.f32 1.5, %v783
    %v785 = vmul.f32 %v780, %v784
    %v786 = vmul.f32 %v776, %v785
    %vm787 = vcmp.eq.f32.partialorder %v776, inf
    %v788 = vsel %vm787, %v776, %v786
    %vm789 = vcmp.eq.f32.partialorder %v776, 0.0
    %v790 = vand.u32 %v776, 2147483648
    %v791 = vsel %vm789, %v790, %v788
    %v792 = vrsqrt.pop %v777
    %v793 = vmul.f32 %v792, %v777
    %v794 = vmul.f32 %v793, %v792
    %v795 = vmul.f32 0.5, %v794
    %v796 = vsub.f32 1.5, %v795
    %v797 = vmul.f32 %v792, %v796
    %v798 = vmul.f32 %v777, %v797
    %vm799 = vcmp.eq.f32.partialorder %v777, inf
    %v800 = vsel %vm799, %v777, %v798
    %vm801 = vcmp.eq.f32.partialorder %v777, 0.0
    %v802 = vand.u32 %v777, 2147483648
    %v803 = vsel %vm801, %v802, %v800
    %v804 = vrsqrt.pop %v778
    %v805 = vmul.f32 %v804, %v778
    %v806 = vmul.f32 %v805, %v804
    %v807 = vmul.f32 0.5, %v806
    %v808 = vsub.f32 1.5, %v807
    %v809 = vmul.f32 %v804, %v808
    %v810 = vmul.f32 %v778, %v809
    %vm811 = vcmp.eq.f32.partialorder %v778, inf
    %v812 = vsel %vm811, %v778, %v810
    %vm813 = vcmp.eq.f32.partialorder %v778, 0.0
    %v814 = vand.u32 %v778, 2147483648
    %v815 = vsel %vm813, %v814, %v812
    %v816 = vrsqrt.pop %v779
    %v817 = vmul.f32 %v816, %v779
    %v818 = vmul.f32 %v817, %v816
    %v819 = vmul.f32 0.5, %v818
    %v820 = vsub.f32 1.5, %v819
    %v821 = vmul.f32 %v816, %v820
    %v822 = vmul.f32 %v779, %v821
    %vm823 = vcmp.eq.f32.partialorder %v779, inf
    %v824 = vsel %vm823, %v779, %v822
    %vm825 = vcmp.eq.f32.partialorder %v779, 0.0
    %v826 = vand.u32 %v779, 2147483648
    %v827 = vsel %vm825, %v826, %v824
    %v828 = vmul.f32 %v791, 0.5
    %v829 = vmul.f32 %v803, 0.5
    %v830 = vmul.f32 %v815, 0.5
    %v831 = vmul.f32 %v827, 0.5
    %v832 = vtanh.pop %v828
    %v833 = vtanh.pop %v829
    %v834 = vtanh.pop %v830
    %v835 = vtanh.pop %v831
    %v836 = vld [vmem:[%s8] sm:$0x1]
    %v837 = vld [vmem:[%s9] sm:$0x1]
    %v838 = vld [vmem:[%s10] sm:$0x1]
    %839 = vrot.lane.b32.xlu0 %v832, 1
    %v840 = vpop.permute.xlu0 %839
    %841 = vrot.lane.b32.xlu0 %v833, 1
    %v842 = vpop.permute.xlu0 %841
    %843 = vrot.lane.b32.xlu0 %v834, 1
    %v844 = vpop.permute.xlu0 %843
    %845 = vrot.lane.b32.xlu0 %v835, 1
    %v846 = vpop.permute.xlu0 %845
    %847 = vrot.lane.b32.xlu0 %v832, 6
    %v848 = vpop.permute.xlu0 %847
    %849 = vrot.lane.b32.xlu0 %v833, 6
    %v850 = vpop.permute.xlu0 %849
    %851 = vrot.lane.b32.xlu0 %v834, 6
    %v852 = vpop.permute.xlu0 %851
    %853 = vrot.lane.b32.xlu0 %v835, 6
    %v854 = vpop.permute.xlu0 %853
    %v856 = vperm.slane %v836, 0
    %v858 = vadd.f32 %v840, %v856
    %v859 = vadd.f32 %v842, %v856
    %v860 = vadd.f32 %v844, %v856
    %v861 = vadd.f32 %v846, %v856
    %v863 = vperm.slane %v837, 0
    %v865 = vadd.f32 %v848, %v863
    %v866 = vadd.f32 %v850, %v863
    %v867 = vadd.f32 %v852, %v863
    %v868 = vadd.f32 %v854, %v863
    %v869 = vmin.f32 %v858, %v865
    %v870 = vmin.f32 %v859, %v866
    %v871 = vmin.f32 %v860, %v867
    %v872 = vmin.f32 %v861, %v868
    %v874 = vperm.slane %v838, 0
    %v876 = vmul.f32 %v874, %v869
    %v877 = vmul.f32 %v874, %v870
    %v878 = vmul.f32 %v874, %v871
    %v879 = vmul.f32 %v874, %v872
    %v880 = vadd.f32 %v832, %v876
    %v881 = vadd.f32 %v833, %v877
    %v882 = vadd.f32 %v834, %v878
    %v883 = vadd.f32 %v835, %v879
    %884 = vrot.lane.b32.xlu0 %v880, 1
    %v885 = vpop.permute.xlu0 %884
    %886 = vrot.lane.b32.xlu0 %v881, 1
    %v887 = vpop.permute.xlu0 %886
    %888 = vrot.lane.b32.xlu0 %v882, 1
    %v889 = vpop.permute.xlu0 %888
    %890 = vrot.lane.b32.xlu0 %v883, 1
    %v891 = vpop.permute.xlu0 %890
    %892 = vrot.lane.b32.xlu0 %v880, 6
    %v893 = vpop.permute.xlu0 %892
    %894 = vrot.lane.b32.xlu0 %v881, 6
    %v895 = vpop.permute.xlu0 %894
    %896 = vrot.lane.b32.xlu0 %v882, 6
    %v897 = vpop.permute.xlu0 %896
    %898 = vrot.lane.b32.xlu0 %v883, 6
    %v899 = vpop.permute.xlu0 %898
    %v900 = vadd.f32 %v885, %v856
    %v901 = vadd.f32 %v887, %v856
    %v902 = vadd.f32 %v889, %v856
    %v903 = vadd.f32 %v891, %v856
    %v904 = vadd.f32 %v893, %v863
    %v905 = vadd.f32 %v895, %v863
    %v906 = vadd.f32 %v897, %v863
    %v907 = vadd.f32 %v899, %v863
    %v908 = vmin.f32 %v900, %v904
    %v909 = vmin.f32 %v901, %v905
    %v910 = vmin.f32 %v902, %v906
    %v911 = vmin.f32 %v903, %v907
    %v912 = vmul.f32 %v874, %v908
    %v913 = vmul.f32 %v874, %v909
    %v914 = vmul.f32 %v874, %v910
    %v915 = vmul.f32 %v874, %v911
    %v916 = vadd.f32 %v832, %v912
    %v917 = vadd.f32 %v833, %v913
    %v918 = vadd.f32 %v834, %v914
    %v919 = vadd.f32 %v835, %v915
    %920 = vrot.lane.b32.xlu0 %v916, 1
    %v921 = vpop.permute.xlu0 %920
    %922 = vrot.lane.b32.xlu0 %v917, 1
    %v923 = vpop.permute.xlu0 %922
    %924 = vrot.lane.b32.xlu0 %v918, 1
    %v925 = vpop.permute.xlu0 %924
    %926 = vrot.lane.b32.xlu0 %v919, 1
    %v927 = vpop.permute.xlu0 %926
    %928 = vrot.lane.b32.xlu0 %v916, 6
    %v929 = vpop.permute.xlu0 %928
    %930 = vrot.lane.b32.xlu0 %v917, 6
    %v931 = vpop.permute.xlu0 %930
    %932 = vrot.lane.b32.xlu0 %v918, 6
    %v933 = vpop.permute.xlu0 %932
    %934 = vrot.lane.b32.xlu0 %v919, 6
    %v935 = vpop.permute.xlu0 %934
    %v936 = vadd.f32 %v921, %v856
    %v937 = vadd.f32 %v923, %v856
    %v938 = vadd.f32 %v925, %v856
    %v939 = vadd.f32 %v927, %v856
    %v940 = vadd.f32 %v929, %v863
    %v941 = vadd.f32 %v931, %v863
    %v942 = vadd.f32 %v933, %v863
    %v943 = vadd.f32 %v935, %v863
    %v944 = vmin.f32 %v936, %v940
    %v945 = vmin.f32 %v937, %v941
    %v946 = vmin.f32 %v938, %v942
    %v947 = vmin.f32 %v939, %v943
    %v948 = vmul.f32 %v874, %v944
    %v949 = vmul.f32 %v874, %v945
    %v950 = vmul.f32 %v874, %v946
    %v951 = vmul.f32 %v874, %v947
    %v952 = vadd.f32 %v832, %v948
    %v953 = vadd.f32 %v833, %v949
    %v954 = vadd.f32 %v834, %v950
    %v955 = vadd.f32 %v835, %v951
    %956 = vrot.lane.b32.xlu0 %v952, 1
    %v957 = vpop.permute.xlu0 %956
    %958 = vrot.lane.b32.xlu0 %v953, 1
    %v959 = vpop.permute.xlu0 %958
    %960 = vrot.lane.b32.xlu0 %v954, 1
    %v961 = vpop.permute.xlu0 %960
    %962 = vrot.lane.b32.xlu0 %v955, 1
    %v963 = vpop.permute.xlu0 %962
    %964 = vrot.lane.b32.xlu0 %v952, 6
    %v965 = vpop.permute.xlu0 %964
    %966 = vrot.lane.b32.xlu0 %v953, 6
    %v967 = vpop.permute.xlu0 %966
    %968 = vrot.lane.b32.xlu0 %v954, 6
    %v969 = vpop.permute.xlu0 %968
    %970 = vrot.lane.b32.xlu0 %v955, 6
    %v971 = vpop.permute.xlu0 %970
    %v972 = vadd.f32 %v957, %v856
    %v973 = vadd.f32 %v959, %v856
    %v974 = vadd.f32 %v961, %v856
    %v975 = vadd.f32 %v963, %v856
    %v976 = vadd.f32 %v965, %v863
    %v977 = vadd.f32 %v967, %v863
    %v978 = vadd.f32 %v969, %v863
    %v979 = vadd.f32 %v971, %v863
    %v980 = vmin.f32 %v972, %v976
    %v981 = vmin.f32 %v973, %v977
    %v982 = vmin.f32 %v974, %v978
    %v983 = vmin.f32 %v975, %v979
    %v984 = vmul.f32 %v874, %v980
    %v985 = vmul.f32 %v874, %v981
    %v986 = vmul.f32 %v874, %v982
    %v987 = vmul.f32 %v874, %v983
    %v988 = vadd.f32 %v832, %v984
    %v989 = vadd.f32 %v833, %v985
    %v990 = vadd.f32 %v834, %v986
    %v991 = vadd.f32 %v835, %v987
    %992 = vrot.lane.b32.xlu0 %v988, 1
    %v993 = vpop.permute.xlu0 %992
    %994 = vrot.lane.b32.xlu0 %v989, 1
    %v995 = vpop.permute.xlu0 %994
    %996 = vrot.lane.b32.xlu0 %v990, 1
    %v997 = vpop.permute.xlu0 %996
    %998 = vrot.lane.b32.xlu0 %v991, 1
    %v999 = vpop.permute.xlu0 %998
    %1000 = vrot.lane.b32.xlu0 %v988, 6
    %v1001 = vpop.permute.xlu0 %1000
    %1002 = vrot.lane.b32.xlu0 %v989, 6
    %v1003 = vpop.permute.xlu0 %1002
    %1004 = vrot.lane.b32.xlu0 %v990, 6
    %v1005 = vpop.permute.xlu0 %1004
    %1006 = vrot.lane.b32.xlu0 %v991, 6
    %v1007 = vpop.permute.xlu0 %1006
    %v1008 = vadd.f32 %v993, %v856
    %v1009 = vadd.f32 %v995, %v856
    %v1010 = vadd.f32 %v997, %v856
    %v1011 = vadd.f32 %v999, %v856
    %v1012 = vadd.f32 %v1001, %v863
    %v1013 = vadd.f32 %v1003, %v863
    %v1014 = vadd.f32 %v1005, %v863
    %v1015 = vadd.f32 %v1007, %v863
    %v1016 = vmin.f32 %v1008, %v1012
    %v1017 = vmin.f32 %v1009, %v1013
    %v1018 = vmin.f32 %v1010, %v1014
    %v1019 = vmin.f32 %v1011, %v1015
    %v1020 = vmul.f32 %v874, %v1016
    %v1021 = vmul.f32 %v874, %v1017
    %v1022 = vmul.f32 %v874, %v1018
    %v1023 = vmul.f32 %v874, %v1019
    %v1024 = vadd.f32 %v832, %v1020
    %v1025 = vadd.f32 %v833, %v1021
    %v1026 = vadd.f32 %v834, %v1022
    %v1027 = vadd.f32 %v835, %v1023
    %1028 = vrot.lane.b32.xlu0 %v1024, 1
    %v1029 = vpop.permute.xlu0 %1028
    %1030 = vrot.lane.b32.xlu0 %v1025, 1
    %v1031 = vpop.permute.xlu0 %1030
    %1032 = vrot.lane.b32.xlu0 %v1026, 1
    %v1033 = vpop.permute.xlu0 %1032
    %1034 = vrot.lane.b32.xlu0 %v1027, 1
    %v1035 = vpop.permute.xlu0 %1034
    %1036 = vrot.lane.b32.xlu0 %v1024, 6
    %v1037 = vpop.permute.xlu0 %1036
    %1038 = vrot.lane.b32.xlu0 %v1025, 6
    %v1039 = vpop.permute.xlu0 %1038
    %1040 = vrot.lane.b32.xlu0 %v1026, 6
    %v1041 = vpop.permute.xlu0 %1040
    %1042 = vrot.lane.b32.xlu0 %v1027, 6
    %v1043 = vpop.permute.xlu0 %1042
    %v1044 = vadd.f32 %v1029, %v856
    %v1045 = vadd.f32 %v1031, %v856
    %v1046 = vadd.f32 %v1033, %v856
    %v1047 = vadd.f32 %v1035, %v856
    %v1048 = vadd.f32 %v1037, %v863
    %v1049 = vadd.f32 %v1039, %v863
    %v1050 = vadd.f32 %v1041, %v863
    %v1051 = vadd.f32 %v1043, %v863
    %v1052 = vmin.f32 %v1044, %v1048
    %v1053 = vmin.f32 %v1045, %v1049
    %v1054 = vmin.f32 %v1046, %v1050
    %v1055 = vmin.f32 %v1047, %v1051
    %v1056 = vmul.f32 %v874, %v1052
    %v1057 = vmul.f32 %v874, %v1053
    %v1058 = vmul.f32 %v874, %v1054
    %v1059 = vmul.f32 %v874, %v1055
    %v1060 = vadd.f32 %v832, %v1056
    %v1061 = vadd.f32 %v833, %v1057
    %v1062 = vadd.f32 %v834, %v1058
    %v1063 = vadd.f32 %v835, %v1059
    %1064 = vrot.lane.b32.xlu0 %v1060, 1
    %v1065 = vpop.permute.xlu0 %1064
    %1066 = vrot.lane.b32.xlu0 %v1061, 1
    %v1067 = vpop.permute.xlu0 %1066
    %1068 = vrot.lane.b32.xlu0 %v1062, 1
    %v1069 = vpop.permute.xlu0 %1068
    %1070 = vrot.lane.b32.xlu0 %v1063, 1
    %v1071 = vpop.permute.xlu0 %1070
    %1072 = vrot.lane.b32.xlu0 %v1060, 6
    %v1073 = vpop.permute.xlu0 %1072
    %1074 = vrot.lane.b32.xlu0 %v1061, 6
    %v1075 = vpop.permute.xlu0 %1074
    %1076 = vrot.lane.b32.xlu0 %v1062, 6
    %v1077 = vpop.permute.xlu0 %1076
    %1078 = vrot.lane.b32.xlu0 %v1063, 6
    %v1079 = vpop.permute.xlu0 %1078
    %v1080 = vadd.f32 %v1065, %v856
    %v1081 = vadd.f32 %v1067, %v856
    %v1082 = vadd.f32 %v1069, %v856
    %v1083 = vadd.f32 %v1071, %v856
    %v1084 = vadd.f32 %v1073, %v863
    %v1085 = vadd.f32 %v1075, %v863
    %v1086 = vadd.f32 %v1077, %v863
    %v1087 = vadd.f32 %v1079, %v863
    %v1088 = vmin.f32 %v1080, %v1084
    %v1089 = vmin.f32 %v1081, %v1085
    %v1090 = vmin.f32 %v1082, %v1086
    %v1091 = vmin.f32 %v1083, %v1087
    %v1092 = vmul.f32 %v874, %v1088
    %v1093 = vmul.f32 %v874, %v1089
    %v1094 = vmul.f32 %v874, %v1090
    %v1095 = vmul.f32 %v874, %v1091
    %v1096 = vadd.f32 %v832, %v1092
    %v1097 = vadd.f32 %v833, %v1093
    %v1098 = vadd.f32 %v834, %v1094
    %v1099 = vadd.f32 %v835, %v1095
    %1100 = vrot.lane.b32.xlu0 %v1096, 1
    %v1101 = vpop.permute.xlu0 %1100
    %1102 = vrot.lane.b32.xlu0 %v1097, 1
    %v1103 = vpop.permute.xlu0 %1102
    %1104 = vrot.lane.b32.xlu0 %v1098, 1
    %v1105 = vpop.permute.xlu0 %1104
    %1106 = vrot.lane.b32.xlu0 %v1099, 1
    %v1107 = vpop.permute.xlu0 %1106
    %1108 = vrot.lane.b32.xlu0 %v1096, 6
    %v1109 = vpop.permute.xlu0 %1108
    %1110 = vrot.lane.b32.xlu0 %v1097, 6
    %v1111 = vpop.permute.xlu0 %1110
    %1112 = vrot.lane.b32.xlu0 %v1098, 6
    %v1113 = vpop.permute.xlu0 %1112
    %1114 = vrot.lane.b32.xlu0 %v1099, 6
    %v1115 = vpop.permute.xlu0 %1114
    %v1116 = vadd.f32 %v1101, %v856
    %v1117 = vadd.f32 %v1103, %v856
    %v1118 = vadd.f32 %v1105, %v856
    %v1119 = vadd.f32 %v1107, %v856
    %v1120 = vadd.f32 %v1109, %v863
    %v1121 = vadd.f32 %v1111, %v863
    %v1122 = vadd.f32 %v1113, %v863
    %v1123 = vadd.f32 %v1115, %v863
    %v1124 = vmin.f32 %v1116, %v1120
    %v1125 = vmin.f32 %v1117, %v1121
    %v1126 = vmin.f32 %v1118, %v1122
    %v1127 = vmin.f32 %v1119, %v1123
    %v1128 = vmul.f32 %v874, %v1124
    %v1129 = vmul.f32 %v874, %v1125
    %v1130 = vmul.f32 %v874, %v1126
    %v1131 = vmul.f32 %v874, %v1127
    %v1132 = vadd.f32 %v832, %v1128
    %v1133 = vadd.f32 %v833, %v1129
    %v1134 = vadd.f32 %v834, %v1130
    %v1135 = vadd.f32 %v835, %v1131
    %1136 = vrot.lane.b32.xlu0 %v1132, 1
    %v1137 = vpop.permute.xlu0 %1136
    %1138 = vrot.lane.b32.xlu0 %v1133, 1
    %v1139 = vpop.permute.xlu0 %1138
    %1140 = vrot.lane.b32.xlu0 %v1134, 1
    %v1141 = vpop.permute.xlu0 %1140
    %1142 = vrot.lane.b32.xlu0 %v1135, 1
    %v1143 = vpop.permute.xlu0 %1142
    %1144 = vrot.lane.b32.xlu0 %v1132, 6
    %v1145 = vpop.permute.xlu0 %1144
    %1146 = vrot.lane.b32.xlu0 %v1133, 6
    %v1147 = vpop.permute.xlu0 %1146
    %1148 = vrot.lane.b32.xlu0 %v1134, 6
    %v1149 = vpop.permute.xlu0 %1148
    %1150 = vrot.lane.b32.xlu0 %v1135, 6
    %v1151 = vpop.permute.xlu0 %1150
    %v1152 = vadd.f32 %v1137, %v856
    %v1153 = vadd.f32 %v1139, %v856
    %v1154 = vadd.f32 %v1141, %v856
    %v1155 = vadd.f32 %v1143, %v856
    %v1156 = vadd.f32 %v1145, %v863
    %v1157 = vadd.f32 %v1147, %v863
    %v1158 = vadd.f32 %v1149, %v863
    %v1159 = vadd.f32 %v1151, %v863
    %v1160 = vmin.f32 %v1152, %v1156
    %v1161 = vmin.f32 %v1153, %v1157
    %v1162 = vmin.f32 %v1154, %v1158
    %v1163 = vmin.f32 %v1155, %v1159
    %v1164 = vmul.f32 %v874, %v1160
    %v1165 = vmul.f32 %v874, %v1161
    %v1166 = vmul.f32 %v874, %v1162
    %v1167 = vmul.f32 %v874, %v1163
    %v1168 = vadd.f32 %v832, %v1164
    %v1169 = vadd.f32 %v833, %v1165
    %v1170 = vadd.f32 %v834, %v1166
    %v1171 = vadd.f32 %v835, %v1167
    %1172 = vrot.lane.b32.xlu0 %v1168, 1
    %v1173 = vpop.permute.xlu0 %1172
    %1174 = vrot.lane.b32.xlu0 %v1169, 1
    %v1175 = vpop.permute.xlu0 %1174
    %1176 = vrot.lane.b32.xlu0 %v1170, 1
    %v1177 = vpop.permute.xlu0 %1176
    %1178 = vrot.lane.b32.xlu0 %v1171, 1
    %v1179 = vpop.permute.xlu0 %1178
    %1180 = vrot.lane.b32.xlu0 %v1168, 6
    %v1181 = vpop.permute.xlu0 %1180
    %1182 = vrot.lane.b32.xlu0 %v1169, 6
    %v1183 = vpop.permute.xlu0 %1182
    %1184 = vrot.lane.b32.xlu0 %v1170, 6
    %v1185 = vpop.permute.xlu0 %1184
    %1186 = vrot.lane.b32.xlu0 %v1171, 6
    %v1187 = vpop.permute.xlu0 %1186
    %v1188 = vadd.f32 %v1173, %v856
    %v1189 = vadd.f32 %v1175, %v856
    %v1190 = vadd.f32 %v1177, %v856
    %v1191 = vadd.f32 %v1179, %v856
    %v1192 = vadd.f32 %v1181, %v863
    %v1193 = vadd.f32 %v1183, %v863
    %v1194 = vadd.f32 %v1185, %v863
    %v1195 = vadd.f32 %v1187, %v863
    %v1196 = vmin.f32 %v1188, %v1192
    %v1197 = vmin.f32 %v1189, %v1193
    %v1198 = vmin.f32 %v1190, %v1194
    %v1199 = vmin.f32 %v1191, %v1195
    %v1200 = vmul.f32 %v874, %v1196
    %v1201 = vmul.f32 %v874, %v1197
    %v1202 = vmul.f32 %v874, %v1198
    %v1203 = vmul.f32 %v874, %v1199
    %v1204 = vadd.f32 %v832, %v1200
    %v1205 = vadd.f32 %v833, %v1201
    %v1206 = vadd.f32 %v834, %v1202
    %v1207 = vadd.f32 %v835, %v1203
    %v1208 = vsub.f32 %v1204, %v1206
    %v1209 = vsub.f32 %v1205, %v1207
    %v1210 = vsub.f32 %v293, %v301
    %v1211 = vsub.f32 %v296, %v304
    %v1212 = vadd.f32 %v1210, 0.3
    %v1213 = vadd.f32 %v1211, 0.3
    %v1214 = vmax.f32 %v1212, 0.0
    %v1215 = vmax.f32 %v1213, 0.0
    %v1216 = vadd.f32 %v1208, 0.3
    %v1217 = vadd.f32 %v1209, 0.3
    %v1218 = vmax.f32 %v1216, 0.0
    %v1219 = vmax.f32 %v1217, 0.0
    %v1220 = vadd.f32 %v1214, %v1218
    %v1221 = vadd.f32 %v1215, %v1219
    %v1222 = vld [vmem:[#allocation13] sm:$0xff]
    %v1223 = vld [vmem:[#allocation13 + $0x8] sm:$0xff]
    %1226 = vrot.lane.b32.xlu0 %v1222, 35
    %v1227 = vpop.permute.xlu0 %1226
    %1228 = vrot.lane.b32.xlu0 %v1223, 35
    %v1229 = vpop.permute.xlu0 %1228
    %v1232 = vmul.f32 %v1220, %v1227
    %v1233 = vmul.f32 %v1221, %v1229
    %vm1234 = vcmask 294168
    %v1235 = vsel %vm1234, %v1232, 0.0
    %v1236 = vsel %vm1234, %v1233, 0.0
    %v1237 = vadd.f32 %v1235, %v1236
    %v1238 = vrot.slane %v1237, 4
    %v1239 = vadd.f32 %v1237, %v1238
    %v1240 = vrot.slane %v1239, 2
    %v1241 = vadd.f32 %v1239, %v1240
    %v1242 = vrot.slane %v1241, 1
    %v1243 = vadd.f32 %v1241, %v1242
    %v1244 = vmul.f32 %v1243, 0.083333336
    %1246 = vrot.lane.b32.xlu0 %v1244, 93
    %v1247 = vpop.permute.xlu0 %1246
    %vm1249 = vcmask 0
    %1250 = vst.msk [vmem:[#allocation16] sm:$0x1] %vm1249, %v1247
    // Predicated region
    $region78: #{run.1} parent=1 // pred_check
      _
    $region79: #{run.1} parent=1 // pred_check_branch
      %1252 = sbr.rel (0) target = $region81
    $region80: #{run.1} parent=1 // pred_region
      %1254 = vsyncadd [#allocation4], 0
      %s1256 = sshll.u32 [#allocation16], 4
      %s1257 = int_to_ptr.vmem [resolvable:$true] %s1256
      %s1258 = sshll.u32 %s11, 4
      %s1259 = int_to_ptr.hbm [resolvable:$true] %s1258
      %1261 = dma.vmem_to_hbm [thread:$0]  %s1257, 16, %s1259, [#allocation4]
    $region81: #{run.1} parent=1 // pred_fallthru
      _
    // Predicated region
    $region82: #{run.1} parent=1 // pred_check
      _
    $region83: #{run.1} parent=1 // pred_check_branch
      %1263 = sbr.rel (0) target = $region85
    $region84: #{run.1} parent=1 // pred_region
      %1265 = dma.done [#allocation4], 16
    $region85: #{run.1} parent=1 // pred_fallthru
      _
    %1266 = vsyncpa [#allocation3], 1
    %1267 = vsyncpa [#allocation6], 1
    %1268 = vsyncpa [#allocation9], 1
    %1269 = vsyncpa [#allocation12], 1
    %1270 = vsyncpa [#allocation15], 1
    %1271 = vsyncpa [#allocation4], 1

</llo_original>
